<compile_context>
chip_gen: v7x
topology: tpu7x:2x2x1
jax: 0.10.0
libtpu: 0.0.40
codegen_flags: <defaults>
</compile_context>

<pallas_src>
import jax
import jax.numpy as jnp
from jax import lax
from jax.experimental import pallas as pl
from jax.experimental.pallas import tpu as pltpu


def _fp_kernel(k_aug_ref, u_aug_ref, unk_feats_ref, known_feats_ref,
               w1i_ref, w1u_ref, b1_ref, w2_ref, b2_ref, out_ref):
    k_aug = k_aug_ref[0]            # (m, 8)   f32  [-2x,-2y,-2z,1,||k||^2,0,0,0]
    u_aug = u_aug_ref[0]            # (8, tn)  f32  [x;y;z;||u||^2;1;0;0;0]
    uf = unk_feats_ref[0]           # (C1, tn) bf16
    kf = known_feats_ref[0]         # (C2, m)  bf16

    m = k_aug.shape[0]

    # --- pairwise squared distances, transposed (m, tn): one MXU pass, no VPU ----
    d2 = jnp.maximum(jnp.dot(k_aug, u_aug, preferred_element_type=jnp.float32), 0.0)

    # --- three_nn: fused (value | index) min-reduce along the sublane (m) axis ---
    # Non-negative f32 bit patterns order like int32, so clearing the low
    # ceil(log2(m)) mantissa bits and OR-ing the row index gives min distance AND
    # earliest-index tie-break from a single int32 min.  Distance selection is
    # quantized to ~2^-(23-idx_bits) relative (m asserted < 2^22 in the wrapper;
    # BIG_KEY assumes d2 bit patterns < 0x7F000000, i.e. finite coordinates).
    idx_bits = max((m - 1).bit_length(), 1)
    idx_mask = (1 << idx_bits) - 1
    row = lax.broadcasted_iota(jnp.int32, d2.shape, 0)
    packed = (pltpu.bitcast(d2, jnp.int32) & jnp.int32(~idx_mask)) | row
    BIG_KEY = jnp.int32(0x7F000000)          # bit pattern of a huge positive float

    wacc = jnp.zeros(d2.shape, jnp.float32)              # (m, tn) unnormalized w
    norm = jnp.zeros((1, d2.shape[1]), jnp.float32)      # (1, tn)
    for j in range(3):
        pmin = jnp.min(packed, axis=0, keepdims=True)                   # (1, tn)
        d2j = pltpu.bitcast(pmin & jnp.int32(~idx_mask), jnp.float32)   # (1, tn)
        recip = 1.0 / (jnp.sqrt(d2j) + 1e-8)                            # dist_recip
        hot = packed == pmin            # unique per column (index bits) -> one row
        wacc = wacc + recip * hot.astype(jnp.float32)
        norm = norm + recip
        if j < 2:
            packed = jnp.where(hot, BIG_KEY, packed)

    # --- three_interpolate: native (C2, m) @ (m, tn), normalize the small result -
    interp = jnp.dot(kf, wacc.astype(jnp.bfloat16),
                     preferred_element_type=jnp.float32)                # (C2, tn)
    interp = interp * pl.reciprocal(norm, approx=True)                  # bcast (1,tn)

    # --- SharedMLP (BN scale folded into weights; concat split into two matmuls) -
    h = (jnp.dot(w1i_ref[...], interp.astype(jnp.bfloat16),
                 preferred_element_type=jnp.float32)
         + jnp.dot(w1u_ref[...], uf, preferred_element_type=jnp.float32))
    h = jnp.maximum(h + b1_ref[...], 0.0)
    h = jnp.dot(w2_ref[...], h.astype(jnp.bfloat16),
                preferred_element_type=jnp.float32)
    h = jnp.maximum(h + b2_ref[...], 0.0)

    out_ref[0] = h.astype(out_ref.dtype)


def pointnet_fp_pallas(unknown, known, unknow_feats, known_feats, params):
    B, n, _ = unknown.shape
    _, m, _ = known.shape
    C1 = unknow_feats.shape[1]
    C2 = known_feats.shape[1]
    w1, s1, b1, w2, s2, b2 = params
    H1, H2 = w1.shape[0], w2.shape[0]

    # Packed (dist|idx) argmin needs the index bits to stay inside the mantissa.
    assert m < (1 << 22), "m too large for the packed (distance|index) argmin"

    # Fold the BatchNorm scale into the conv weights; split layer-1 weights so the
    # kernel never materializes the concat.  Matmul operands go to bf16.
    # TODO(synk): training-mode batch statistics not modeled; BN folded at inference.
    w1f = w1 * s1
    w1i = w1f[:, :C2].astype(jnp.bfloat16)
    w1u = w1f[:, C2:].astype(jnp.bfloat16)
    w2f = (w2 * s2).astype(jnp.bfloat16)
    b1f = b1.astype(jnp.float32)
    b2f = b2.astype(jnp.float32)

    # --- generation-aware tile / VMEM budgeting ---------------------------------
    try:
        phys_vmem = int(getattr(pltpu.get_tpu_info(), "vmem_capacity_bytes",
                                64 << 20))
    except Exception:  # pragma: no cover - conservative fallback (assume v7x)
        phys_vmem = 64 << 20
    # v7x has 64 MiB physical VMEM per TC -> cap scoped VMEM ~36 MiB; v5e/v6e have
    # 128 MiB -> allow a much larger tile_n to amortize per-step overhead.
    budget = (36 << 20) if phys_vmem <= (64 << 20) else (96 << 20)

    # Live (m, tile_n) intermediates (~7 arrays) dominate; streamed blocks are
    # double-buffered; batch-constant blocks counted in `fixed`.
    per_col = 28 * m + 2 * (4 * 8 + 2 * C1 + 4 * H2) + 4 * (C2 + 2 * H1 + H2)
    fixed = (2 * (4 * 8 * m + 2 * C2 * m)
             + 4 * (H1 * (C1 + C2) + H2 * H1 + H1 + H2) + (2 << 20))
    tile_cap = int((0.85 * budget - fixed) // per_col)
    tile_cap = max(128, min(2048, (tile_cap // 128) * 128))

    n128 = ((n + 127) // 128) * 128
    tile_n = min(tile_cap, n128)
    if B == 1 and n128 >= 256:
        # keep >=2 parallel grid steps so both v7x TensorCores get work
        tile_n = min(tile_n, max(128, ((n128 // 2) // 128) * 128))
    n_tiles = -(-n128 // tile_n)
    n_pad = n_tiles * tile_n

    # Pad n with zeros (origin points / zero features); padded columns sliced off.
    if n_pad != n:
        unknown = jnp.pad(unknown, ((0, 0), (0, n_pad - n), (0, 0)))
        unknow_feats = jnp.pad(unknow_feats, ((0, 0), (0, 0), (0, n_pad - n)))

    # Augmented coordinates so d2 = k_aug @ u_aug is a single MXU matmul.
    uf32 = unknown.astype(jnp.float32)
    kf32 = known.astype(jnp.float32)
    u_aug = jnp.concatenate([
        jnp.transpose(uf32, (0, 2, 1)),                     # x, y, z    (B,3,n_pad)
        jnp.sum(uf32 * uf32, axis=-1)[:, None, :],          # ||u||^2    (B,1,n_pad)
        jnp.ones((B, 1, n_pad), jnp.float32),
        jnp.zeros((B, 3, n_pad), jnp.float32)], axis=1)     # -> (B, 8, n_pad)
    k_aug = jnp.concatenate([
        -2.0 * kf32,                                        # -2x,-2y,-2z (B,m,3)
        jnp.ones((B, m, 1), jnp.float32),
        jnp.sum(kf32 * kf32, axis=-1, keepdims=True),       # ||k||^2
        jnp.zeros((B, m, 3), jnp.float32)], axis=-1)        # -> (B, m, 8)

    uf_bf = unknow_feats.astype(jnp.bfloat16)
    kf_bf = known_feats.astype(jnp.bfloat16)

    grid = (B, n_tiles)
    # TODO(synk): batch-constant blocks (k_aug/known_feats/weights) could use
    # pipeline_mode=pl.Buffered(1) to reclaim VMEM on v7x; left default-buffered.
    out = pl.pallas_call(
        _fp_kernel,
        out_shape=jax.ShapeDtypeStruct((B, H2, n_pad), jnp.float32),
        grid=grid,
        in_specs=[
            pl.BlockSpec((1, m, 8), lambda b, t: (b, 0, 0)),
            pl.BlockSpec((1, 8, tile_n), lambda b, t: (b, 0, t)),
            pl.BlockSpec((1, C1, tile_n), lambda b, t: (b, 0, t)),
            pl.BlockSpec((1, C2, m), lambda b, t: (b, 0, 0)),
            pl.BlockSpec((H1, C2), lambda b, t: (0, 0)),
            pl.BlockSpec((H1, C1), lambda b, t: (0, 0)),
            pl.BlockSpec((H1, 1), lambda b, t: (0, 0)),
            pl.BlockSpec((H2, H1), lambda b, t: (0, 0)),
            pl.BlockSpec((H2, 1), lambda b, t: (0, 0)),
        ],
        out_specs=pl.BlockSpec((1, H2, tile_n), lambda b, t: (b, 0, t)),
        compiler_params=pltpu.CompilerParams(
            dimension_semantics=("parallel", "parallel"),
            vmem_limit_bytes=int(budget)),
    )(k_aug, u_aug, uf_bf, kf_bf, w1i, w1u, b1f, w2f, b2f)

    return out[:, :, :n]


def reference_fp(unknown, known, unknow_feats, known_feats, params):
    """Pure-JAX reference mirroring PointnetFPModule.forward (known is not None)."""
    w1, s1, b1, w2, s2, b2 = params
    u2 = jnp.sum(unknown ** 2, -1, keepdims=True)                     # (B,n,1)
    k2 = jnp.sum(known ** 2, -1, keepdims=True)                       # (B,m,1)
    cross = jnp.einsum('bnd,bmd->bnm', unknown, known,
                       preferred_element_type=jnp.float32)
    d2 = jnp.maximum(u2 + jnp.swapaxes(k2, 1, 2) - 2.0 * cross, 0.0)
    idx = jnp.argsort(d2, axis=-1)[..., :3]                           # (B,n,3)
    d2s = jnp.take_along_axis(d2, idx, axis=-1)
    dist = jnp.sqrt(d2s)
    recip = 1.0 / (dist + 1e-8)
    w = recip / jnp.sum(recip, -1, keepdims=True)                     # (B,n,3)
    gathered = jax.vmap(lambda kf, ix: kf[:, ix])(known_feats, idx)   # (B,C2,n,3)
    interp = jnp.sum(gathered * w[:, None, :, :], axis=-1)            # (B,C2,n)
    feats = jnp.concatenate([interp, unknow_feats], axis=1)
    h = jnp.einsum('oc,bcn->bon', w1, feats, preferred_element_type=jnp.float32)
    h = jnp.maximum(s1[None] * h + b1[None], 0.0)
    h = jnp.einsum('oc,bcn->bon', w2, h, preferred_element_type=jnp.float32)
    h = jnp.maximum(s2[None] * h + b2[None], 0.0)
    return h


if __name__ == "__main__":
    # Small shapes consistent with the module's forward.
    B, n, m = 2, 128, 64
    C1, C2 = 8, 16
    mlp = [C1 + C2, 32, 32]            # PointnetFPModule(mlp=[24, 32, 32])
    H1, H2 = mlp[1], mlp[2]

    key = jax.random.PRNGKey(0)
    k_u, k_k, k_uf, k_kf, k_w1, k_w2 = jax.random.split(key, 6)

    unknown = jax.random.uniform(k_u, (B, n, 3), dtype=jnp.float32)
    known = jax.random.uniform(k_k, (B, m, 3), dtype=jnp.float32)
    unknow_feats = jax.random.normal(k_uf, (B, C1, n), dtype=jnp.float32)
    known_feats = jax.random.normal(k_kf, (B, C2, m), dtype=jnp.float32)

    # Conv2d 1x1 weights (bias=False since bn=True in pt_utils.SharedMLP).
    w1 = jax.random.normal(k_w1, (H1, mlp[0]), dtype=jnp.float32) / jnp.sqrt(mlp[0])
    w2 = jax.random.normal(k_w2, (H2, H1), dtype=jnp.float32) / jnp.sqrt(H1)

    # BatchNorm folded to scale/shift (gamma=1, beta=0, mean=0, var=1, eps=1e-5).
    eps = 1e-5
    s1 = jnp.full((H1, 1), 1.0 / jnp.sqrt(1.0 + eps), dtype=jnp.float32)
    b1 = jnp.zeros((H1, 1), dtype=jnp.float32)
    s2 = jnp.full((H2, 1), 1.0 / jnp.sqrt(1.0 + eps), dtype=jnp.float32)
    b2 = jnp.zeros((H2, 1), dtype=jnp.float32)
    params = (w1, s1, b1, w2, s2, b2)

    out = pointnet_fp_pallas(unknown, known, unknow_feats, known_feats, params)
    out = jax.block_until_ready(out)

    ref = reference_fp(unknown, known, unknow_feats, known_feats, params)
    assert out.shape == (B, H2, n)
    assert bool(jnp.all(jnp.isfinite(out)))
    assert bool(jnp.allclose(out, ref, atol=3e-2, rtol=3e-2)), \
        f"max abs diff {float(jnp.max(jnp.abs(out - ref)))}"

    print("KERNEL_OK")
</pallas_src>

<mosaic_0001>
module attributes {stable_mosaic.version = 11 : i64} {
  func.func @_fp_kernel(%arg0: i32, %arg1: i32, %arg2: memref<1x64x8xf32, #tpu.memory_space<vmem>>, %arg3: memref<1x8x128xf32, #tpu.memory_space<vmem>>, %arg4: memref<1x8x128xbf16, #tpu.memory_space<vmem>>, %arg5: memref<1x16x64xbf16, #tpu.memory_space<vmem>>, %arg6: memref<32x16xbf16, #tpu.memory_space<vmem>>, %arg7: memref<32x8xbf16, #tpu.memory_space<vmem>>, %arg8: memref<32x1xf32, #tpu.memory_space<vmem>>, %arg9: memref<32x32xbf16, #tpu.memory_space<vmem>>, %arg10: memref<32x1xf32, #tpu.memory_space<vmem>>, %arg11: memref<1x32x128xf32, #tpu.memory_space<vmem>>) attributes {dimension_semantics = [#tpu.dimension_semantics<parallel>, #tpu.dimension_semantics<parallel>], iteration_bounds = array<i64: 2, 1>, scalar_prefetch = 0 : i64, scratch_operands = 0 : i64, tpu.core_type = #tpu.core_type<tc>, window_params = [{transform_indices = @transform_0, window_bounds = array<i64: 1, 64, 8>}, {transform_indices = @transform_1, window_bounds = array<i64: 1, 8, 128>}, {transform_indices = @transform_2, window_bounds = array<i64: 1, 8, 128>}, {transform_indices = @transform_3, window_bounds = array<i64: 1, 16, 64>}, {pipeline_mode = #tpu.pipeline_mode<synchronous>, transform_indices = @transform_4, window_bounds = array<i64: 32, 16>}, {pipeline_mode = #tpu.pipeline_mode<synchronous>, transform_indices = @transform_5, window_bounds = array<i64: 32, 8>}, {pipeline_mode = #tpu.pipeline_mode<synchronous>, transform_indices = @transform_6, window_bounds = array<i64: 32, 1>}, {pipeline_mode = #tpu.pipeline_mode<synchronous>, transform_indices = @transform_7, window_bounds = array<i64: 32, 32>}, {pipeline_mode = #tpu.pipeline_mode<synchronous>, transform_indices = @transform_8, window_bounds = array<i64: 32, 1>}, {transform_indices = @transform_9, window_bounds = array<i64: 1, 32, 128>}]} {
    %c0 = arith.constant 0 : index
    %c0_0 = arith.constant 0 : index
    %c0_1 = arith.constant 0 : index
    %0 = vector.load %arg2[%c0, %c0_0, %c0_1] : memref<1x64x8xf32, #tpu.memory_space<vmem>>, vector<1x64x8xf32>
    %1 = vector.shape_cast %0 : vector<1x64x8xf32> to vector<64x8xf32>
    %c0_2 = arith.constant 0 : index
    %c0_3 = arith.constant 0 : index
    %c0_4 = arith.constant 0 : index
    %2 = vector.load %arg3[%c0_2, %c0_3, %c0_4] : memref<1x8x128xf32, #tpu.memory_space<vmem>>, vector<1x8x128xf32>
    %3 = vector.shape_cast %2 : vector<1x8x128xf32> to vector<8x128xf32>
    %c0_5 = arith.constant 0 : index
    %c0_6 = arith.constant 0 : index
    %c0_7 = arith.constant 0 : index
    %4 = vector.load %arg4[%c0_5, %c0_6, %c0_7] : memref<1x8x128xbf16, #tpu.memory_space<vmem>>, vector<1x8x128xbf16>
    %5 = vector.shape_cast %4 : vector<1x8x128xbf16> to vector<8x128xbf16>
    %c0_8 = arith.constant 0 : index
    %c0_9 = arith.constant 0 : index
    %c0_10 = arith.constant 0 : index
    %6 = vector.load %arg5[%c0_8, %c0_9, %c0_10] : memref<1x16x64xbf16, #tpu.memory_space<vmem>>, vector<1x16x64xbf16>
    %7 = vector.shape_cast %6 : vector<1x16x64xbf16> to vector<16x64xbf16>
    %cst = arith.constant dense<0.000000e+00> : vector<64x128xf32>
    %8 = tpu.matmul %1, %3, %cst {dimension_numbers = #tpu.dot_dimension_numbers<[1], [0], [0], [1], [0, 0, 1, 1], [], []>} : vector<64x8xf32>, vector<8x128xf32>, vector<64x128xf32> -> vector<64x128xf32>
    %cst_11 = arith.constant 0.000000e+00 : f32
    %9 = vector.broadcast %cst_11 : f32 to vector<64x128xf32>
    %10 = arith.maximumf %8, %9 : vector<64x128xf32>
    %11 = tpu.iota {dimensions = array<i32: 0>} : vector<64x128xi32>
    %12 = tpu.bitcast %10 : vector<64x128xf32> -> vector<64x128xi32>
    %c-64_i32 = arith.constant -64 : i32
    %13 = vector.broadcast %c-64_i32 : i32 to vector<64x128xi32>
    %14 = arith.andi %12, %13 : vector<64x128xi32>
    %15 = arith.ori %14, %11 : vector<64x128xi32>
    %cst_12 = arith.constant 0.000000e+00 : f32
    %16 = vector.broadcast %cst_12 : f32 to vector<64x128xf32>
    %cst_13 = arith.constant 0.000000e+00 : f32
    %17 = vector.broadcast %cst_13 : f32 to vector<1x128xf32>
    %cst_14 = arith.constant dense<2147483647> : vector<128xi32>
    %18 = vector.multi_reduction <minsi>, %15, %cst_14 [0] : vector<64x128xi32> to vector<128xi32>
    %19 = vector.shape_cast %18 : vector<128xi32> to vector<1x128xi32>
    %c-64_i32_15 = arith.constant -64 : i32
    %20 = vector.broadcast %c-64_i32_15 : i32 to vector<1x128xi32>
    %21 = arith.andi %19, %20 : vector<1x128xi32>
    %22 = tpu.bitcast %21 : vector<1x128xi32> -> vector<1x128xf32>
    %23 = math.sqrt %22 : vector<1x128xf32>
    %cst_16 = arith.constant 9.99999993E-9 : f32
    %24 = vector.broadcast %cst_16 : f32 to vector<1x128xf32>
    %25 = arith.addf %23, %24 : vector<1x128xf32>
    %cst_17 = arith.constant 1.000000e+00 : f32
    %26 = vector.broadcast %cst_17 : f32 to vector<1x128xf32>
    %27 = arith.divf %26, %25 : vector<1x128xf32>
    %28 = vector.broadcast %19 : vector<1x128xi32> to vector<64x128xi32>
    %29 = arith.cmpi eq, %15, %28 : vector<64x128xi32>
    %30 = arith.extui %29 : vector<64x128xi1> to vector<64x128xi32>
    %31 = arith.sitofp %30 : vector<64x128xi32> to vector<64x128xf32>
    %32 = vector.broadcast %27 : vector<1x128xf32> to vector<64x128xf32>
    %33 = arith.mulf %32, %31 : vector<64x128xf32>
    %34 = arith.addf %16, %33 : vector<64x128xf32>
    %35 = arith.addf %17, %27 : vector<1x128xf32>
    %c2130706432_i32 = arith.constant 2130706432 : i32
    %36 = vector.broadcast %c2130706432_i32 : i32 to vector<64x128xi32>
    %37 = arith.select %29, %36, %15 : vector<64x128xi1>, vector<64x128xi32>
    %cst_18 = arith.constant dense<2147483647> : vector<128xi32>
    %38 = vector.multi_reduction <minsi>, %37, %cst_18 [0] : vector<64x128xi32> to vector<128xi32>
    %39 = vector.shape_cast %38 : vector<128xi32> to vector<1x128xi32>
    %c-64_i32_19 = arith.constant -64 : i32
    %40 = vector.broadcast %c-64_i32_19 : i32 to vector<1x128xi32>
    %41 = arith.andi %39, %40 : vector<1x128xi32>
    %42 = tpu.bitcast %41 : vector<1x128xi32> -> vector<1x128xf32>
    %43 = math.sqrt %42 : vector<1x128xf32>
    %cst_20 = arith.constant 9.99999993E-9 : f32
    %44 = vector.broadcast %cst_20 : f32 to vector<1x128xf32>
    %45 = arith.addf %43, %44 : vector<1x128xf32>
    %cst_21 = arith.constant 1.000000e+00 : f32
    %46 = vector.broadcast %cst_21 : f32 to vector<1x128xf32>
    %47 = arith.divf %46, %45 : vector<1x128xf32>
    %48 = vector.broadcast %39 : vector<1x128xi32> to vector<64x128xi32>
    %49 = arith.cmpi eq, %37, %48 : vector<64x128xi32>
    %50 = arith.extui %49 : vector<64x128xi1> to vector<64x128xi32>
    %51 = arith.sitofp %50 : vector<64x128xi32> to vector<64x128xf32>
    %52 = vector.broadcast %47 : vector<1x128xf32> to vector<64x128xf32>
    %53 = arith.mulf %52, %51 : vector<64x128xf32>
    %54 = arith.addf %34, %53 : vector<64x128xf32>
    %55 = arith.addf %35, %47 : vector<1x128xf32>
    %c2130706432_i32_22 = arith.constant 2130706432 : i32
    %56 = vector.broadcast %c2130706432_i32_22 : i32 to vector<64x128xi32>
    %57 = arith.select %49, %56, %37 : vector<64x128xi1>, vector<64x128xi32>
    %cst_23 = arith.constant dense<2147483647> : vector<128xi32>
    %58 = vector.multi_reduction <minsi>, %57, %cst_23 [0] : vector<64x128xi32> to vector<128xi32>
    %59 = vector.shape_cast %58 : vector<128xi32> to vector<1x128xi32>
    %c-64_i32_24 = arith.constant -64 : i32
    %60 = vector.broadcast %c-64_i32_24 : i32 to vector<1x128xi32>
    %61 = arith.andi %59, %60 : vector<1x128xi32>
    %62 = tpu.bitcast %61 : vector<1x128xi32> -> vector<1x128xf32>
    %63 = math.sqrt %62 : vector<1x128xf32>
    %cst_25 = arith.constant 9.99999993E-9 : f32
    %64 = vector.broadcast %cst_25 : f32 to vector<1x128xf32>
    %65 = arith.addf %63, %64 : vector<1x128xf32>
    %cst_26 = arith.constant 1.000000e+00 : f32
    %66 = vector.broadcast %cst_26 : f32 to vector<1x128xf32>
    %67 = arith.divf %66, %65 : vector<1x128xf32>
    %68 = vector.broadcast %59 : vector<1x128xi32> to vector<64x128xi32>
    %69 = arith.cmpi eq, %57, %68 : vector<64x128xi32>
    %70 = arith.extui %69 : vector<64x128xi1> to vector<64x128xi32>
    %71 = arith.sitofp %70 : vector<64x128xi32> to vector<64x128xf32>
    %72 = vector.broadcast %67 : vector<1x128xf32> to vector<64x128xf32>
    %73 = arith.mulf %72, %71 : vector<64x128xf32>
    %74 = arith.addf %54, %73 : vector<64x128xf32>
    %75 = arith.addf %55, %67 : vector<1x128xf32>
    %76 = arith.truncf %74 : vector<64x128xf32> to vector<64x128xbf16>
    %cst_27 = arith.constant dense<0.000000e+00> : vector<16x128xf32>
    %77 = tpu.matmul %7, %76, %cst_27 {dimension_numbers = #tpu.dot_dimension_numbers<[1], [0], [0], [1], [0, 0, 1, 1], [], []>} : vector<16x64xbf16>, vector<64x128xbf16>, vector<16x128xf32> -> vector<16x128xf32>
    %78 = tpu.reciprocal %75 {approx = true} : vector<1x128xf32> -> vector<1x128xf32>
    %79 = vector.broadcast %78 : vector<1x128xf32> to vector<16x128xf32>
    %80 = arith.mulf %77, %79 : vector<16x128xf32>
    %c0_28 = arith.constant 0 : index
    %c0_29 = arith.constant 0 : index
    %81 = vector.load %arg6[%c0_28, %c0_29] : memref<32x16xbf16, #tpu.memory_space<vmem>>, vector<32x16xbf16>
    %82 = arith.truncf %80 : vector<16x128xf32> to vector<16x128xbf16>
    %cst_30 = arith.constant dense<0.000000e+00> : vector<32x128xf32>
    %83 = tpu.matmul %81, %82, %cst_30 {dimension_numbers = #tpu.dot_dimension_numbers<[1], [0], [0], [1], [0, 0, 1, 1], [], []>} : vector<32x16xbf16>, vector<16x128xbf16>, vector<32x128xf32> -> vector<32x128xf32>
    %c0_31 = arith.constant 0 : index
    %c0_32 = arith.constant 0 : index
    %84 = vector.load %arg7[%c0_31, %c0_32] : memref<32x8xbf16, #tpu.memory_space<vmem>>, vector<32x8xbf16>
    %cst_33 = arith.constant dense<0.000000e+00> : vector<32x128xf32>
    %85 = tpu.matmul %84, %5, %cst_33 {dimension_numbers = #tpu.dot_dimension_numbers<[1], [0], [0], [1], [0, 0, 1, 1], [], []>} : vector<32x8xbf16>, vector<8x128xbf16>, vector<32x128xf32> -> vector<32x128xf32>
    %86 = arith.addf %83, %85 : vector<32x128xf32>
    %c0_34 = arith.constant 0 : index
    %c0_35 = arith.constant 0 : index
    %87 = vector.load %arg8[%c0_34, %c0_35] : memref<32x1xf32, #tpu.memory_space<vmem>>, vector<32x1xf32>
    %88 = vector.broadcast %87 : vector<32x1xf32> to vector<32x128xf32>
    %89 = arith.addf %86, %88 : vector<32x128xf32>
    %cst_36 = arith.constant 0.000000e+00 : f32
    %90 = vector.broadcast %cst_36 : f32 to vector<32x128xf32>
    %91 = arith.maximumf %89, %90 : vector<32x128xf32>
    %c0_37 = arith.constant 0 : index
    %c0_38 = arith.constant 0 : index
    %92 = vector.load %arg9[%c0_37, %c0_38] : memref<32x32xbf16, #tpu.memory_space<vmem>>, vector<32x32xbf16>
    %93 = arith.truncf %91 : vector<32x128xf32> to vector<32x128xbf16>
    %cst_39 = arith.constant dense<0.000000e+00> : vector<32x128xf32>
    %94 = tpu.matmul %92, %93, %cst_39 {dimension_numbers = #tpu.dot_dimension_numbers<[1], [0], [0], [1], [0, 0, 1, 1], [], []>} : vector<32x32xbf16>, vector<32x128xbf16>, vector<32x128xf32> -> vector<32x128xf32>
    %c0_40 = arith.constant 0 : index
    %c0_41 = arith.constant 0 : index
    %95 = vector.load %arg10[%c0_40, %c0_41] : memref<32x1xf32, #tpu.memory_space<vmem>>, vector<32x1xf32>
    %96 = vector.broadcast %95 : vector<32x1xf32> to vector<32x128xf32>
    %97 = arith.addf %94, %96 : vector<32x128xf32>
    %cst_42 = arith.constant 0.000000e+00 : f32
    %98 = vector.broadcast %cst_42 : f32 to vector<32x128xf32>
    %99 = arith.maximumf %97, %98 : vector<32x128xf32>
    %c0_43 = arith.constant 0 : index
    %c0_44 = arith.constant 0 : index
    %c0_45 = arith.constant 0 : index
    %100 = vector.load %arg11[%c0_43, %c0_44, %c0_45] : memref<1x32x128xf32, #tpu.memory_space<vmem>>, vector<1x32x128xf32>
    %101 = vector.shape_cast %100 : vector<1x32x128xf32> to vector<32x128xf32>
    %102 = vector.shape_cast %99 : vector<32x128xf32> to vector<1x32x128xf32>
    tpu.vector_store %arg11[%c0_43, %c0_44, %c0_45], %102 {strides = array<i32>} : memref<1x32x128xf32, #tpu.memory_space<vmem>>, vector<1x32x128xf32>,
    return
  }
  func.func @transform_0(%arg0: i32, %arg1: i32) -> (i32, i32, i32) {
    %c0_i32 = arith.constant 0 : i32
    %c0_i32_0 = arith.constant 0 : i32
    %c0_i32_1 = arith.constant 0 : i32
    return %arg0, %c0_i32, %c0_i32_0 : i32, i32, i32
  }
  func.func @transform_1(%arg0: i32, %arg1: i32) -> (i32, i32, i32) {
    %c0_i32 = arith.constant 0 : i32
    %c0_i32_0 = arith.constant 0 : i32
    return %arg0, %c0_i32, %arg1 : i32, i32, i32
  }
  func.func @transform_2(%arg0: i32, %arg1: i32) -> (i32, i32, i32) {
    %c0_i32 = arith.constant 0 : i32
    %c0_i32_0 = arith.constant 0 : i32
    return %arg0, %c0_i32, %arg1 : i32, i32, i32
  }
  func.func @transform_3(%arg0: i32, %arg1: i32) -> (i32, i32, i32) {
    %c0_i32 = arith.constant 0 : i32
    %c0_i32_0 = arith.constant 0 : i32
    %c0_i32_1 = arith.constant 0 : i32
    return %arg0, %c0_i32, %c0_i32_0 : i32, i32, i32
  }
  func.func @transform_4(%arg0: i32, %arg1: i32) -> (i32, i32) {
    %c0_i32 = arith.constant 0 : i32
    %c0_i32_0 = arith.constant 0 : i32
    %c0_i32_1 = arith.constant 0 : i32
    return %c0_i32, %c0_i32_0 : i32, i32
  }
  func.func @transform_5(%arg0: i32, %arg1: i32) -> (i32, i32) {
    %c0_i32 = arith.constant 0 : i32
    %c0_i32_0 = arith.constant 0 : i32
    %c0_i32_1 = arith.constant 0 : i32
    return %c0_i32, %c0_i32_0 : i32, i32
  }
  func.func @transform_6(%arg0: i32, %arg1: i32) -> (i32, i32) {
    %c0_i32 = arith.constant 0 : i32
    %c0_i32_0 = arith.constant 0 : i32
    %c0_i32_1 = arith.constant 0 : i32
    return %c0_i32, %c0_i32_0 : i32, i32
  }
  func.func @transform_7(%arg0: i32, %arg1: i32) -> (i32, i32) {
    %c0_i32 = arith.constant 0 : i32
    %c0_i32_0 = arith.constant 0 : i32
    %c0_i32_1 = arith.constant 0 : i32
    return %c0_i32, %c0_i32_0 : i32, i32
  }
  func.func @transform_8(%arg0: i32, %arg1: i32) -> (i32, i32) {
    %c0_i32 = arith.constant 0 : i32
    %c0_i32_0 = arith.constant 0 : i32
    %c0_i32_1 = arith.constant 0 : i32
    return %c0_i32, %c0_i32_0 : i32, i32
  }
  func.func @transform_9(%arg0: i32, %arg1: i32) -> (i32, i32, i32) {
    %c0_i32 = arith.constant 0 : i32
    %c0_i32_0 = arith.constant 0 : i32
    return %arg0, %c0_i32, %arg1 : i32, i32, i32
  }
}

</mosaic_0001>

<llo_original>
// kernel: tpu_custom_call.1
$region0: #{tpu_custom_call.1}
  #allocation0 [shape = 'u32[]', space=smem, size = 0x4, offset = 0x4, fixed_abs, tag = 'smem constant byte address 0x4 - core index']
  #allocation1 [shape = 'u32[144,128]{1,0:T(1,128)}', space=vmem, size = 0x12000, scoped, tag = 'internal scratch']
  %s0 = inlined_call_operand.vmem [shape: f32[2,64,8], index: 0, kind: input, shape index: {}]
  %s1 = inlined_call_operand.vmem [shape: f32[2,8,128], index: 1, kind: input, shape index: {}]
  %s2 = inlined_call_operand.vmem [shape: bf16[2,8,128], index: 2, kind: input, shape index: {}]
  %s3 = inlined_call_operand.vmem [shape: bf16[2,16,64], index: 3, kind: input, shape index: {}]
  %s4 = inlined_call_operand.vmem [shape: bf16[32,16], index: 4, kind: input, shape index: {}]
  %s5 = inlined_call_operand.vmem [shape: bf16[32,8], index: 5, kind: input, shape index: {}]
  %s6 = inlined_call_operand.vmem [shape: f32[32,1], index: 6, kind: input, shape index: {}]
  %s7 = inlined_call_operand.vmem [shape: bf16[32,32], index: 7, kind: input, shape index: {}]
  %s8 = inlined_call_operand.vmem [shape: f32[32,1], index: 8, kind: input, shape index: {}]
  %s9 = inlined_call_operand.hbm [shape: f32[2,32,128], index: 9, kind: output, shape index: {}]
  %s10 = sld [smem:[#allocation0]]
  $region69: #{tpu_custom_call.1} parent=0
    _
  %s12 = ssub.s32 1, %s10
  %s13 = scalar_select 0, %s12, %s10
  $region1: #{tpu_custom_call.1} parent=0
    #allocation2 [shape = 'u8[32768]{0}', space=vmem, size = 0x8000, scoped, tag = 'output window, operand 0']
    #allocation3 [shape = 's32[2]{0}', space=sflag, size = 0x8, scoped, tag = 'scoped memory for tpu_custom_call.1']
    %14 = vsyncpa [#allocation3], 0
    %s15 = scalar_lea.sflag [#allocation3], 1
    %16 = vsyncpa %s15, 0
    loop: start=0, step=1, limit=4
    $region2: #{tpu_custom_call.1} parent=1 // loop_pre_header
      _
    $region3: #{tpu_custom_call.1} parent=1 // loop_header
      %s18 = sphi 0, %s22
      %p19 = scmp.ge.s32.totalorder %s18, 4
      %s25 = sphi 0, %s37
      %s26 = sphi 0, %s33
      %s27 = sphi 0, %s25
      %s28 = sphi 0, %s26
      %s29 = sphi 0, %s27
      %s30 = sphi 0, %s28
      %s40 = sphi 0, %s42
      %s43 = sphi 0, %s40
      %s44 = sphi 0, %s43
      %s60 = sphi 0, %s44
      %s68 = sphi 0, %s70
      %s71 = sphi 0, %s68
      %s72 = sphi 0, %s71
      %s88 = sphi 0, %s72
      %s96 = sphi 0, %s98
      %s99 = sphi 0, %s96
      %s100 = sphi 0, %s99
      %s116 = sphi 0, %s100
      %s122 = sphi 0, %s124
      %s125 = sphi 0, %s122
      %s126 = sphi 0, %s125
      %s142 = sphi 0, %s126
      %s146 = sphi 0, %s146
      %s148 = sphi 0, %s146
      %s149 = sphi 0, %s148
      %s163 = sphi 0, %s149
      %s167 = sphi 0, %s167
      %s169 = sphi 0, %s167
      %s170 = sphi 0, %s169
      %s184 = sphi 0, %s170
      %s188 = sphi 0, %s188
      %s190 = sphi 0, %s188
      %s191 = sphi 0, %s190
      %s205 = sphi 0, %s191
      %s209 = sphi 0, %s209
      %s211 = sphi 0, %s209
      %s212 = sphi 0, %s211
      %s226 = sphi 0, %s212
      %s230 = sphi 0, %s230
      %s232 = sphi 0, %s230
      %s233 = sphi 0, %s232
      %s247 = sphi 0, %s233
      %s255 = sphi 0, %s257
      %s258 = sphi 0, %s255
      %s259 = sphi 0, %s258
      %s275 = sphi 0, %s259
    $region4: #{tpu_custom_call.1} parent=1 // loop_header_branch
      %21 = sbr.rel (%p19) target = $region8
    $region5: #{tpu_custom_call.1} parent=1 // loop_body
      %s23 = ssub.s32 %s18, 1
      %s24 = ssub.s32 %s18, 2
      %s31 = sadd.s32 1, %s26
      %p32 = scmp.ge.s32.totalorder %s31, 1
      %s33 = scalar_select %p32, 0, %s31
      %s34 = sadd.s32 1, %s25
      %s35 = scalar_select %p32, %s34, %s25
      %p36 = scmp.ge.s32.totalorder %s35, 2
      %s37 = scalar_select %p36, 0, %s35
      %s38 = ssub.s32 %s25, %s37
      %p39 = scmp.eq.s32.totalorder %s38, 0
      %s41 = sadd.s32 %s40, 1
      %s42 = scalar_select %p39, %s40, %s41
      %p45 = pneg %p39
      %p46 = scmp.eq.s32.totalorder %s18, 1
      %p47 = por %p45, %p46
      %p48 = scmp.ne.s32.totalorder %s40, %s43
      %p49 = scmp.eq.s32.totalorder %s18, 0
      %p50 = por %p48, %p49
      %p51 = scmp.ne.s32.totalorder %s40, %s43
      %p52 = scmp.eq.s32.totalorder %s23, 1
      %p53 = por %p51, %p52
      %p54 = scmp.ne.s32.totalorder %s43, %s44
      %p55 = scmp.eq.s32.totalorder %s23, 0
      %p56 = por %p54, %p55
      %p57 = scmp.ne.s32.totalorder %s43, %s44
      %p58 = scmp.eq.s32.totalorder %s24, 1
      %p59 = por %p57, %p58
      %p61 = scmp.ne.s32.totalorder %s44, %s60
      %p62 = scmp.eq.s32.totalorder %s24, 0
      %p63 = por %p61, %p62
      %s64 = ssub.s32 %s25, %s37
      %s65 = ssub.s32 %s26, %s33
      %s66 = sor.u32 %s64, %s65
      %p67 = scmp.eq.s32.totalorder %s66, 0
      %s69 = sadd.s32 %s68, 1
      %s70 = scalar_select %p67, %s68, %s69
      %p73 = pneg %p67
      %p74 = scmp.eq.s32.totalorder %s18, 1
      %p75 = por %p73, %p74
      %p76 = scmp.ne.s32.totalorder %s68, %s71
      %p77 = scmp.eq.s32.totalorder %s18, 0
      %p78 = por %p76, %p77
      %p79 = scmp.ne.s32.totalorder %s68, %s71
      %p80 = scmp.eq.s32.totalorder %s23, 1
      %p81 = por %p79, %p80
      %p82 = scmp.ne.s32.totalorder %s71, %s72
      %p83 = scmp.eq.s32.totalorder %s23, 0
      %p84 = por %p82, %p83
      %p85 = scmp.ne.s32.totalorder %s71, %s72
      %p86 = scmp.eq.s32.totalorder %s24, 1
      %p87 = por %p85, %p86
      %p89 = scmp.ne.s32.totalorder %s72, %s88
      %p90 = scmp.eq.s32.totalorder %s24, 0
      %p91 = por %p89, %p90
      %s92 = ssub.s32 %s25, %s37
      %s93 = ssub.s32 %s26, %s33
      %s94 = sor.u32 %s92, %s93
      %p95 = scmp.eq.s32.totalorder %s94, 0
      %s97 = sadd.s32 %s96, 1
      %s98 = scalar_select %p95, %s96, %s97
      %p101 = pneg %p95
      %p102 = scmp.eq.s32.totalorder %s18, 1
      %p103 = por %p101, %p102
      %p104 = scmp.ne.s32.totalorder %s96, %s99
      %p105 = scmp.eq.s32.totalorder %s18, 0
      %p106 = por %p104, %p105
      %p107 = scmp.ne.s32.totalorder %s96, %s99
      %p108 = scmp.eq.s32.totalorder %s23, 1
      %p109 = por %p107, %p108
      %p110 = scmp.ne.s32.totalorder %s99, %s100
      %p111 = scmp.eq.s32.totalorder %s23, 0
      %p112 = por %p110, %p111
      %p113 = scmp.ne.s32.totalorder %s99, %s100
      %p114 = scmp.eq.s32.totalorder %s24, 1
      %p115 = por %p113, %p114
      %p117 = scmp.ne.s32.totalorder %s100, %s116
      %p118 = scmp.eq.s32.totalorder %s24, 0
      %p119 = por %p117, %p118
      %s120 = ssub.s32 %s25, %s37
      %p121 = scmp.eq.s32.totalorder %s120, 0
      %s123 = sadd.s32 %s122, 1
      %s124 = scalar_select %p121, %s122, %s123
      %p127 = pneg %p121
      %p128 = scmp.eq.s32.totalorder %s18, 1
      %p129 = por %p127, %p128
      %p130 = scmp.ne.s32.totalorder %s122, %s125
      %p131 = scmp.eq.s32.totalorder %s18, 0
      %p132 = por %p130, %p131
      %p133 = scmp.ne.s32.totalorder %s122, %s125
      %p134 = scmp.eq.s32.totalorder %s23, 1
      %p135 = por %p133, %p134
      %p136 = scmp.ne.s32.totalorder %s125, %s126
      %p137 = scmp.eq.s32.totalorder %s23, 0
      %p138 = por %p136, %p137
      %p139 = scmp.ne.s32.totalorder %s125, %s126
      %p140 = scmp.eq.s32.totalorder %s24, 1
      %p141 = por %p139, %p140
      %p143 = scmp.ne.s32.totalorder %s126, %s142
      %p144 = scmp.eq.s32.totalorder %s24, 0
      %p145 = por %p143, %p144
      %s147 = sadd.s32 %s146, 1
      %p150 = scmp.eq.s32.totalorder %s18, 1
      %p151 = scmp.ne.s32.totalorder %s146, %s148
      %p152 = scmp.eq.s32.totalorder %s18, 0
      %p153 = por %p151, %p152
      %p154 = scmp.ne.s32.totalorder %s146, %s148
      %p155 = scmp.eq.s32.totalorder %s23, 1
      %p156 = por %p154, %p155
      %p157 = scmp.ne.s32.totalorder %s148, %s149
      %p158 = scmp.eq.s32.totalorder %s23, 0
      %p159 = por %p157, %p158
      %p160 = scmp.ne.s32.totalorder %s148, %s149
      %p161 = scmp.eq.s32.totalorder %s24, 1
      %p162 = por %p160, %p161
      %p164 = scmp.ne.s32.totalorder %s149, %s163
      %p165 = scmp.eq.s32.totalorder %s24, 0
      %p166 = por %p164, %p165
      %s168 = sadd.s32 %s167, 1
      %p171 = scmp.eq.s32.totalorder %s18, 1
      %p172 = scmp.ne.s32.totalorder %s167, %s169
      %p173 = scmp.eq.s32.totalorder %s18, 0
      %p174 = por %p172, %p173
      %p175 = scmp.ne.s32.totalorder %s167, %s169
      %p176 = scmp.eq.s32.totalorder %s23, 1
      %p177 = por %p175, %p176
      %p178 = scmp.ne.s32.totalorder %s169, %s170
      %p179 = scmp.eq.s32.totalorder %s23, 0
      %p180 = por %p178, %p179
      %p181 = scmp.ne.s32.totalorder %s169, %s170
      %p182 = scmp.eq.s32.totalorder %s24, 1
      %p183 = por %p181, %p182
      %p185 = scmp.ne.s32.totalorder %s170, %s184
      %p186 = scmp.eq.s32.totalorder %s24, 0
      %p187 = por %p185, %p186
      %s189 = sadd.s32 %s188, 1
      %p192 = scmp.eq.s32.totalorder %s18, 1
      %p193 = scmp.ne.s32.totalorder %s188, %s190
      %p194 = scmp.eq.s32.totalorder %s18, 0
      %p195 = por %p193, %p194
      %p196 = scmp.ne.s32.totalorder %s188, %s190
      %p197 = scmp.eq.s32.totalorder %s23, 1
      %p198 = por %p196, %p197
      %p199 = scmp.ne.s32.totalorder %s190, %s191
      %p200 = scmp.eq.s32.totalorder %s23, 0
      %p201 = por %p199, %p200
      %p202 = scmp.ne.s32.totalorder %s190, %s191
      %p203 = scmp.eq.s32.totalorder %s24, 1
      %p204 = por %p202, %p203
      %p206 = scmp.ne.s32.totalorder %s191, %s205
      %p207 = scmp.eq.s32.totalorder %s24, 0
      %p208 = por %p206, %p207
      %s210 = sadd.s32 %s209, 1
      %p213 = scmp.eq.s32.totalorder %s18, 1
      %p214 = scmp.ne.s32.totalorder %s209, %s211
      %p215 = scmp.eq.s32.totalorder %s18, 0
      %p216 = por %p214, %p215
      %p217 = scmp.ne.s32.totalorder %s209, %s211
      %p218 = scmp.eq.s32.totalorder %s23, 1
      %p219 = por %p217, %p218
      %p220 = scmp.ne.s32.totalorder %s211, %s212
      %p221 = scmp.eq.s32.totalorder %s23, 0
      %p222 = por %p220, %p221
      %p223 = scmp.ne.s32.totalorder %s211, %s212
      %p224 = scmp.eq.s32.totalorder %s24, 1
      %p225 = por %p223, %p224
      %p227 = scmp.ne.s32.totalorder %s212, %s226
      %p228 = scmp.eq.s32.totalorder %s24, 0
      %p229 = por %p227, %p228
      %s231 = sadd.s32 %s230, 1
      %p234 = scmp.eq.s32.totalorder %s18, 1
      %p235 = scmp.ne.s32.totalorder %s230, %s232
      %p236 = scmp.eq.s32.totalorder %s18, 0
      %p237 = por %p235, %p236
      %p238 = scmp.ne.s32.totalorder %s230, %s232
      %p239 = scmp.eq.s32.totalorder %s23, 1
      %p240 = por %p238, %p239
      %p241 = scmp.ne.s32.totalorder %s232, %s233
      %p242 = scmp.eq.s32.totalorder %s23, 0
      %p243 = por %p241, %p242
      %p244 = scmp.ne.s32.totalorder %s232, %s233
      %p245 = scmp.eq.s32.totalorder %s24, 1
      %p246 = por %p244, %p245
      %p248 = scmp.ne.s32.totalorder %s233, %s247
      %p249 = scmp.eq.s32.totalorder %s24, 0
      %p250 = por %p248, %p249
      %s251 = ssub.s32 %s25, %s37
      %s252 = ssub.s32 %s26, %s33
      %s253 = sor.u32 %s251, %s252
      %p254 = scmp.eq.s32.totalorder %s253, 0
      %s256 = sadd.s32 %s255, 1
      %s257 = scalar_select %p254, %s255, %s256
      %p260 = pneg %p254
      %p261 = scmp.eq.s32.totalorder %s18, 1
      %p262 = por %p260, %p261
      %p263 = scmp.ne.s32.totalorder %s255, %s258
      %p264 = scmp.eq.s32.totalorder %s18, 0
      %p265 = por %p263, %p264
      %p266 = scmp.ne.s32.totalorder %s255, %s258
      %p267 = scmp.eq.s32.totalorder %s23, 1
      %p268 = por %p266, %p267
      %p269 = scmp.ne.s32.totalorder %s258, %s259
      %p270 = scmp.eq.s32.totalorder %s23, 0
      %p271 = por %p269, %p270
      %p272 = scmp.ne.s32.totalorder %s258, %s259
      %p273 = scmp.eq.s32.totalorder %s24, 1
      %p274 = por %p272, %p273
      %p276 = scmp.ne.s32.totalorder %s259, %s275
      %p277 = scmp.eq.s32.totalorder %s24, 0
      %p278 = por %p276, %p277
      %p279 = scmp.le.s32.totalorder 1, %s18
      %p280 = scmp.lt.s32.totalorder %s18, 3
      %p281 = pnand %p279, %p280
      %p282 = pneg %p281
      // Predicated region
      $region9: #{tpu_custom_call.1} parent=5 // pred_check
        _
      $region10: #{tpu_custom_call.1} parent=5 // pred_check_branch
        %284 = sbr.rel (%p281) target = $region12
      $region11: #{tpu_custom_call.1} parent=5 // pred_region
        %s285 = ssub.s32 %s18, 1
        // Predicated region
        $region13: #{tpu_custom_call.1} parent=11 // pred_check
          %p286 = pneg %p159
        $region14: #{tpu_custom_call.1} parent=11 // pred_check_branch
          %288 = sbr.rel (%p286) target = $region16
        $region15: #{tpu_custom_call.1} parent=11 // pred_region
          _
        $region16: #{tpu_custom_call.1} parent=11 // pred_fallthru
          _
        // Predicated region
        $region17: #{tpu_custom_call.1} parent=11 // pred_check
          %p289 = pneg %p180
        $region18: #{tpu_custom_call.1} parent=11 // pred_check_branch
          %291 = sbr.rel (%p289) target = $region20
        $region19: #{tpu_custom_call.1} parent=11 // pred_region
          _
        $region20: #{tpu_custom_call.1} parent=11 // pred_fallthru
          _
        // Predicated region
        $region21: #{tpu_custom_call.1} parent=11 // pred_check
          %p292 = pneg %p201
        $region22: #{tpu_custom_call.1} parent=11 // pred_check_branch
          %294 = sbr.rel (%p292) target = $region24
        $region23: #{tpu_custom_call.1} parent=11 // pred_region
          _
        $region24: #{tpu_custom_call.1} parent=11 // pred_fallthru
          _
        // Predicated region
        $region25: #{tpu_custom_call.1} parent=11 // pred_check
          %p295 = pneg %p222
        $region26: #{tpu_custom_call.1} parent=11 // pred_check_branch
          %297 = sbr.rel (%p295) target = $region28
        $region27: #{tpu_custom_call.1} parent=11 // pred_region
          _
        $region28: #{tpu_custom_call.1} parent=11 // pred_fallthru
          _
        // Predicated region
        $region29: #{tpu_custom_call.1} parent=11 // pred_check
          %p298 = pneg %p243
        $region30: #{tpu_custom_call.1} parent=11 // pred_check_branch
          %300 = sbr.rel (%p298) target = $region32
        $region31: #{tpu_custom_call.1} parent=11 // pred_region
          _
        $region32: #{tpu_custom_call.1} parent=11 // pred_fallthru
          _
      $region12: #{tpu_custom_call.1} parent=5 // pred_fallthru
        _
      %p301 = scmp.lt.s32.totalorder %s18, 2
      // Predicated region
      $region33: #{tpu_custom_call.1} parent=5 // pred_check
        %p302 = pneg %p301
      $region34: #{tpu_custom_call.1} parent=5 // pred_check_branch
        %304 = sbr.rel (%p302) target = $region36
      $region35: #{tpu_custom_call.1} parent=5 // pred_region
        // Predicated region
        $region37: #{tpu_custom_call.1} parent=35 // pred_check
          %p305 = pneg %p50
        $region38: #{tpu_custom_call.1} parent=35 // pred_check_branch
          %307 = sbr.rel (%p305) target = $region40
        $region39: #{tpu_custom_call.1} parent=35 // pred_region
          %p308 = scmp.lt.s32.totalorder %s25, 1
          %s309 = scalar_select %p308, %s25, 1
          %s310 = smul.addr %s309, 8
          %s311 = smul.addr %s310, 8
          %s312 = scalar_lea.vmem %s0, %s311
        $region40: #{tpu_custom_call.1} parent=35 // pred_fallthru
          _
        // Predicated region
        $region41: #{tpu_custom_call.1} parent=35 // pred_check
          %p313 = pneg %p78
        $region42: #{tpu_custom_call.1} parent=35 // pred_check_branch
          %315 = sbr.rel (%p313) target = $region44
        $region43: #{tpu_custom_call.1} parent=35 // pred_region
          %p316 = scmp.lt.s32.totalorder %s25, 1
          %s317 = scalar_select %p316, %s25, 1
          %p318 = scmp.lt.s32.totalorder %s26, 0
          %s319 = scalar_select %p318, %s26, 0
          %s320 = sadd.s32 %s319, %s317
          %s321 = smul.addr %s320, 8
          %s322 = scalar_lea.vmem %s1, %s321
        $region44: #{tpu_custom_call.1} parent=35 // pred_fallthru
          _
        // Predicated region
        $region45: #{tpu_custom_call.1} parent=35 // pred_check
          %p323 = pneg %p106
        $region46: #{tpu_custom_call.1} parent=35 // pred_check_branch
          %325 = sbr.rel (%p323) target = $region48
        $region47: #{tpu_custom_call.1} parent=35 // pred_region
          %p326 = scmp.lt.s32.totalorder %s25, 1
          %s327 = scalar_select %p326, %s25, 1
          %p328 = scmp.lt.s32.totalorder %s26, 0
          %s329 = scalar_select %p328, %s26, 0
          %s330 = sadd.s32 %s329, %s327
          %s331 = smul.addr %s330, 4
          %s332 = scalar_lea.vmem %s2, %s331
        $region48: #{tpu_custom_call.1} parent=35 // pred_fallthru
          _
        // Predicated region
        $region49: #{tpu_custom_call.1} parent=35 // pred_check
          %p333 = pneg %p132
        $region50: #{tpu_custom_call.1} parent=35 // pred_check_branch
          %335 = sbr.rel (%p333) target = $region52
        $region51: #{tpu_custom_call.1} parent=35 // pred_region
          %p336 = scmp.lt.s32.totalorder %s25, 1
          %s337 = scalar_select %p336, %s25, 1
          %s338 = smul.addr %s337, 2
          %s339 = smul.addr %s338, 4
          %s340 = scalar_lea.vmem %s3, %s339
        $region52: #{tpu_custom_call.1} parent=35 // pred_fallthru
          _
      $region36: #{tpu_custom_call.1} parent=5 // pred_fallthru
        _
      %p341 = scmp.le.s32.totalorder 1, %s18
      %p342 = scmp.lt.s32.totalorder %s18, 3
      %p343 = pnand %p341, %p342
      %p344 = pneg %p343
      // Predicated region
      $region53: #{tpu_custom_call.1} parent=5 // pred_check
        _
      $region54: #{tpu_custom_call.1} parent=5 // pred_check_branch
        %346 = sbr.rel (%p343) target = $region56
      $region55: #{tpu_custom_call.1} parent=5 // pred_region
        %s347 = ssub.s32 %s18, 1
        %p348 = scmp.lt.s32.totalorder %s27, 1
        %s349 = scalar_select %p348, %s27, 1
        %s350 = smul.addr %s349, 8
        %s351 = smul.addr %s350, 8
        %s352 = scalar_lea.vmem %s0, %s351
        %p353 = pneg %p56
        %p354 = pneg %p53
        %p355 = scmp.lt.s32.totalorder %s27, 1
        %s356 = scalar_select %p355, %s27, 1
        %p357 = scmp.lt.s32.totalorder %s28, 0
        %s358 = scalar_select %p357, %s28, 0
        %s359 = sadd.s32 %s358, %s356
        %s360 = smul.addr %s359, 8
        %s361 = scalar_lea.vmem %s1, %s360
        %p362 = pneg %p84
        %p363 = pneg %p81
        %p364 = scmp.lt.s32.totalorder %s27, 1
        %s365 = scalar_select %p364, %s27, 1
        %p366 = scmp.lt.s32.totalorder %s28, 0
        %s367 = scalar_select %p366, %s28, 0
        %s368 = sadd.s32 %s367, %s365
        %s369 = smul.addr %s368, 4
        %s370 = scalar_lea.vmem %s2, %s369
        %p371 = pneg %p112
        %p372 = pneg %p109
        %p373 = scmp.lt.s32.totalorder %s27, 1
        %s374 = scalar_select %p373, %s27, 1
        %s375 = smul.addr %s374, 2
        %s376 = smul.addr %s375, 4
        %s377 = scalar_lea.vmem %s3, %s376
        %p378 = pneg %p138
        %p379 = pneg %p135
        %p380 = pneg %p159
        %p381 = pneg %p156
        %p382 = pneg %p180
        %p383 = pneg %p177
        %p384 = pneg %p201
        %p385 = pneg %p198
        %p386 = pneg %p222
        %p387 = pneg %p219
        %p388 = pneg %p243
        %p389 = pneg %p240
        %p390 = pneg %p271
        %p391 = pneg %p268
        %s392 = sand.u32 %s258, 1
        %s393 = scalar_lea.sflag [#allocation3], %s392
        %s394 = sand.u32 %s258, 1
        %s395 = smul.addr %s394, 32
        %s396 = scalar_lea.vmem [#allocation2], %s395
        %p397 = scmp.lt.s32.totalorder %s27, 1
        %s398 = scalar_select %p397, %s27, 1
        %s399 = smul.addr %s398, 8
        %s400 = smul.addr %s399, 8
        %s401 = scalar_lea.vmem %s0, %s400
        %p402 = scmp.lt.s32.totalorder %s27, 1
        %s403 = scalar_select %p402, %s27, 1
        %p404 = scmp.lt.s32.totalorder %s28, 0
        %s405 = scalar_select %p404, %s28, 0
        %s406 = sadd.s32 %s405, %s403
        %s407 = smul.addr %s406, 8
        %s408 = scalar_lea.vmem %s1, %s407
        %p409 = scmp.lt.s32.totalorder %s27, 1
        %s410 = scalar_select %p409, %s27, 1
        %p411 = scmp.lt.s32.totalorder %s28, 0
        %s412 = scalar_select %p411, %s28, 0
        %s413 = sadd.s32 %s412, %s410
        %s414 = smul.addr %s413, 4
        %s415 = scalar_lea.vmem %s2, %s414
        %p416 = scmp.lt.s32.totalorder %s27, 1
        %s417 = scalar_select %p416, %s27, 1
        %s418 = smul.addr %s417, 2
        %s419 = smul.addr %s418, 4
        %s420 = scalar_lea.vmem %s3, %s419
        %v422 = vld [vmem:[%s401] sm:$0xff]
        %v423 = vld [vmem:[%s401 + $0x8] sm:$0xff]
        %v424 = vld [vmem:[%s401 + $0x10] sm:$0xff]
        %v425 = vld [vmem:[%s401 + $0x18] sm:$0xff]
        %v426 = vld [vmem:[%s401 + $0x20] sm:$0xff]
        %v427 = vld [vmem:[%s401 + $0x28] sm:$0xff]
        %v428 = vld [vmem:[%s401 + $0x30] sm:$0xff]
        %v429 = vld [vmem:[%s401 + $0x38] sm:$0xff]
        %v430 = vld [vmem:[%s408] sm:$0xff]
        %v431 = vld [vmem:[%s415] sm:$0xf]
        %v432 = vld [vmem:[%s420] sm:$0xf]
        %v433 = vld [vmem:[%s420 + $0x4] sm:$0xf]
        %vm434 = vcmask 64512
        %v436 = vsel %vm434, %v422, 0
        %v439 = vsel %vm434, %v423, 0
        %v442 = vsel %vm434, %v424, 0
        %v445 = vsel %vm434, %v425, 0
        %v448 = vsel %vm434, %v426, 0
        %v451 = vsel %vm434, %v427, 0
        %v454 = vsel %vm434, %v428, 0
        %v457 = vsel %vm434, %v429, 0
        %459 = vmatprep.subr.mxu0 0.0
        %460 = vmatpush1.msra.mxu0 %v430
        %461 = vmatprep.subr.mxu0 0.0
        %462 = vmatpush1.msra.mxu0 0.0
        %463 = vmatprep.subr.mxu0 0.0
        %464 = vmatpush1.msra.mxu0 0.0
        %465 = vmatprep.subr.mxu0 0.0
        %466 = vmatpush1.msra.mxu0 0.0
        %467 = vmatprep.subr.mxu0 0.0
        %468 = vmatpush1.msra.mxu0 0.0
        %469 = vmatprep.subr.mxu0 0.0
        %470 = vmatpush1.msra.mxu0 0.0
        %471 = vmatprep.subr.mxu0 0.0
        %472 = vmatpush1.msra.mxu0 0.0
        %473 = vmatprep.subr.mxu0 0.0
        %474 = vmatpush1.msra.mxu0 0.0
        %475 = vmatprep.subr.mxu0 0.0
        %476 = vmatpush1.msra.mxu0 0.0
        %477 = vmatprep.subr.mxu0 0.0
        %478 = vmatpush1.msra.mxu0 0.0
        %479 = vmatprep.subr.mxu0 0.0
        %480 = vmatpush1.msra.mxu0 0.0
        %481 = vmatprep.subr.mxu0 0.0
        %482 = vmatpush1.msra.mxu0 0.0
        %483 = vmatprep.subr.mxu0 0.0
        %484 = vmatpush1.msra.mxu0 0.0
        %485 = vmatprep.subr.mxu0 0.0
        %486 = vmatpush1.msra.mxu0 0.0
        %487 = vmatprep.subr.mxu0 0.0
        %488 = vmatpush1.msra.mxu0 0.0
        %489 = vmatprep.subr.mxu0 0.0
        %490 = vmatpush1.msra.mxu0 0.0
        %491 = vmatprep.subr.mxu0 0.0
        %492 = vmatpush1.msra.mxu0 0.0
        %493 = vmatprep.subr.mxu0 0.0
        %494 = vmatpush1.msra.mxu0 0.0
        %495 = vmatprep.subr.mxu0 0.0
        %496 = vmatpush1.msra.mxu0 0.0
        %497 = vmatprep.subr.mxu0 0.0
        %498 = vmatpush1.msra.mxu0 0.0
        %499 = vmatprep.subr.mxu0 0.0
        %500 = vmatpush1.msra.mxu0 0.0
        %501 = vmatprep.subr.mxu0 0.0
        %502 = vmatpush1.msra.mxu0 0.0
        %503 = vmatprep.subr.mxu0 0.0
        %504 = vmatpush1.msra.mxu0 0.0
        %505 = vmatprep.subr.mxu0 0.0
        %506 = vmatpush1.msra.mxu0 0.0
        %507 = vmatprep.subr.mxu0 0.0
        %508 = vmatpush1.msra.mxu0 0.0
        %509 = vmatprep.subr.mxu0 0.0
        %510 = vmatpush1.msra.mxu0 0.0
        %511 = vmatprep.subr.mxu0 0.0
        %512 = vmatpush1.msra.mxu0 0.0
        %513 = vmatprep.subr.mxu0 0.0
        %514 = vmatpush1.msra.mxu0 0.0
        %515 = vmatprep.subr.mxu0 0.0
        %516 = vmatpush1.msra.mxu0 0.0
        %517 = vmatprep.subr.mxu0 0.0
        %518 = vmatpush1.msra.mxu0 0.0
        %519 = vmatprep.subr.mxu0 0.0
        %520 = vmatpush1.msra.mxu0 0.0
        %521 = vmatprep.subr.mxu0 0.0
        %522 = vmatpush1.msra.mxu0 0.0
        %523 = vmatprep.mubr.f32.mxu0 0.0
        %524 = vmatmul.mubr.f32.gmra.mrb[0].mxu0 %v436
        %v525 = vpop.f32.mrb[0].mxu0
        %v526 = vadd.f32 0.0, %v525
        %v527 = vpop.f32.mrb[0].mxu0
        %528 = vmatprep.mubr.f32.mxu0 0.0
        %529 = vmatmul.mubr.f32.gmra.mrb[0].mxu0 %v439
        %v530 = vpop.f32.mrb[0].mxu0
        %v531 = vadd.f32 0.0, %v530
        %v532 = vpop.f32.mrb[0].mxu0
        %533 = vmatprep.mubr.f32.mxu0 0.0
        %534 = vmatmul.mubr.f32.gmra.mrb[0].mxu0 %v442
        %v535 = vpop.f32.mrb[0].mxu0
        %v536 = vadd.f32 0.0, %v535
        %v537 = vpop.f32.mrb[0].mxu0
        %538 = vmatprep.mubr.f32.mxu0 0.0
        %539 = vmatmul.mubr.f32.gmra.mrb[0].mxu0 %v445
        %v540 = vpop.f32.mrb[0].mxu0
        %v541 = vadd.f32 0.0, %v540
        %v542 = vpop.f32.mrb[0].mxu0
        %543 = vmatprep.mubr.f32.mxu0 0.0
        %544 = vmatmul.mubr.f32.gmra.mrb[0].mxu0 %v448
        %v545 = vpop.f32.mrb[0].mxu0
        %v546 = vadd.f32 0.0, %v545
        %v547 = vpop.f32.mrb[0].mxu0
        %548 = vmatprep.mubr.f32.mxu0 0.0
        %549 = vmatmul.mubr.f32.gmra.mrb[0].mxu0 %v451
        %v550 = vpop.f32.mrb[0].mxu0
        %v551 = vadd.f32 0.0, %v550
        %v552 = vpop.f32.mrb[0].mxu0
        %553 = vmatprep.mubr.f32.mxu0 0.0
        %554 = vmatmul.mubr.f32.gmra.mrb[0].mxu0 %v454
        %v555 = vpop.f32.mrb[0].mxu0
        %v556 = vadd.f32 0.0, %v555
        %v557 = vpop.f32.mrb[0].mxu0
        %558 = vmatprep.mubr.f32.mxu0 0.0
        %559 = vmatmul.mubr.f32.gmra.mrb[0].mxu0 %v457
        %v560 = vpop.f32.mrb[0].mxu0
        %v561 = vadd.f32 0.0, %v560
        %v562 = vpop.f32.mrb[0].mxu0
        %563 = vdwg.mxu0
        %v564 = vmax.f32 %v526, 0.0
        %v565 = vmax.f32 %v531, 0.0
        %v566 = vmax.f32 %v536, 0.0
        %v567 = vmax.f32 %v541, 0.0
        %v568 = vmax.f32 %v546, 0.0
        %v569 = vmax.f32 %v551, 0.0
        %v570 = vmax.f32 %v556, 0.0
        %v571 = vmax.f32 %v561, 0.0
        %v572 = vlaneseq
        %v573 = vshrl.u32 %v572, 7
        %v574 = vadd.s32 %v573, 8
        %v575 = vadd.s32 %v573, 16
        %v576 = vadd.s32 %v573, 24
        %v577 = vadd.s32 %v573, 32
        %v578 = vadd.s32 %v573, 40
        %v579 = vadd.s32 %v573, 48
        %v580 = vadd.s32 %v573, 56
        %v589 = vand.u32 %v564, 4294967232
        %v590 = vand.u32 %v565, 4294967232
        %v591 = vand.u32 %v566, 4294967232
        %v592 = vand.u32 %v567, 4294967232
        %v593 = vand.u32 %v568, 4294967232
        %v594 = vand.u32 %v569, 4294967232
        %v595 = vand.u32 %v570, 4294967232
        %v596 = vand.u32 %v571, 4294967232
        %v597 = vor.u32 %v589, %v573
        %v598 = vor.u32 %v590, %v574
        %v599 = vor.u32 %v591, %v575
        %v600 = vor.u32 %v592, %v576
        %v601 = vor.u32 %v593, %v577
        %v602 = vor.u32 %v594, %v578
        %v603 = vor.u32 %v595, %v579
        %v604 = vor.u32 %v596, %v580
        %vm605 = vcmp.lt.s32.totalorder %v597, %v601
        %v606 = vsel %vm605, %v597, %v601
        %vm607 = vcmp.lt.s32.totalorder %v598, %v602
        %v608 = vsel %vm607, %v598, %v602
        %vm609 = vcmp.lt.s32.totalorder %v599, %v603
        %v610 = vsel %vm609, %v599, %v603
        %vm611 = vcmp.lt.s32.totalorder %v600, %v604
        %v612 = vsel %vm611, %v600, %v604
        %vm613 = vcmp.lt.s32.totalorder %v606, %v608
        %v614 = vsel %vm613, %v606, %v608
        %vm615 = vcmp.lt.s32.totalorder %v610, %v612
        %v616 = vsel %vm615, %v610, %v612
        %vm617 = vcmp.lt.s32.totalorder %v614, %v616
        %v618 = vsel %vm617, %v614, %v616
        %v619 = vrot.slane %v618, 4
        %vm620 = vcmp.lt.s32.totalorder %v618, %v619
        %v621 = vsel %vm620, %v618, %v619
        %v622 = vrot.slane %v621, 2
        %vm623 = vcmp.lt.s32.totalorder %v621, %v622
        %v624 = vsel %vm623, %v621, %v622
        %v625 = vrot.slane %v624, 1
        %vm626 = vcmp.lt.s32.totalorder %v624, %v625
        %v627 = vsel %vm626, %v624, %v625
        %v628 = vand.u32 %v627, 4294967232
        %v630 = vrsqrt.pop %v628
        %v631 = vmul.f32 %v628, %v630
        %vm632 = vcmp.eq.f32.partialorder %v628, inf
        %v633 = vsel %vm632, %v628, %v631
        %vm634 = vcmp.eq.f32.partialorder %v628, 0.0
        %v635 = vand.u32 %v628, 2147483648
        %v636 = vsel %vm634, %v635, %v633
        %v637 = vadd.f32 %v636, 1e-08
        %v638 = vrcp.pop %v637
        %v639 = vmul.f32 1.0, %v638
        %vm640 = vcmp.eq.s32.totalorder %v597, %v627
        %vm641 = vcmp.eq.s32.totalorder %v598, %v627
        %vm642 = vcmp.eq.s32.totalorder %v599, %v627
        %vm643 = vcmp.eq.s32.totalorder %v600, %v627
        %vm644 = vcmp.eq.s32.totalorder %v601, %v627
        %vm645 = vcmp.eq.s32.totalorder %v602, %v627
        %vm646 = vcmp.eq.s32.totalorder %v603, %v627
        %vm647 = vcmp.eq.s32.totalorder %v604, %v627
        %v648 = vsel %vm640, 1, 0
        %v649 = vsel %vm641, 1, 0
        %v650 = vsel %vm642, 1, 0
        %v651 = vsel %vm643, 1, 0
        %v652 = vsel %vm644, 1, 0
        %v653 = vsel %vm645, 1, 0
        %v654 = vsel %vm646, 1, 0
        %v655 = vsel %vm647, 1, 0
        %v656 = vcvt.s32.f32 %v648
        %v657 = vcvt.s32.f32 %v649
        %v658 = vcvt.s32.f32 %v650
        %v659 = vcvt.s32.f32 %v651
        %v660 = vcvt.s32.f32 %v652
        %v661 = vcvt.s32.f32 %v653
        %v662 = vcvt.s32.f32 %v654
        %v663 = vcvt.s32.f32 %v655
        %v664 = vmul.f32 %v639, %v656
        %v665 = vmul.f32 %v639, %v657
        %v666 = vmul.f32 %v639, %v658
        %v667 = vmul.f32 %v639, %v659
        %v668 = vmul.f32 %v639, %v660
        %v669 = vmul.f32 %v639, %v661
        %v670 = vmul.f32 %v639, %v662
        %v671 = vmul.f32 %v639, %v663
        %v672 = vadd.f32 %v664, 0.0
        %v673 = vadd.f32 %v665, 0.0
        %v674 = vadd.f32 %v666, 0.0
        %v675 = vadd.f32 %v667, 0.0
        %v676 = vadd.f32 %v668, 0.0
        %v677 = vadd.f32 %v669, 0.0
        %v678 = vadd.f32 %v670, 0.0
        %v679 = vadd.f32 %v671, 0.0
        %v680 = vadd.f32 %v639, 0.0
        %v681 = vsel %vm640, 2130706432, %v597
        %v682 = vsel %vm641, 2130706432, %v598
        %v683 = vsel %vm642, 2130706432, %v599
        %v684 = vsel %vm643, 2130706432, %v600
        %v685 = vsel %vm644, 2130706432, %v601
        %v686 = vsel %vm645, 2130706432, %v602
        %v687 = vsel %vm646, 2130706432, %v603
        %v688 = vsel %vm647, 2130706432, %v604
        %vm689 = vcmp.lt.s32.totalorder %v681, %v685
        %v690 = vsel %vm689, %v681, %v685
        %vm691 = vcmp.lt.s32.totalorder %v682, %v686
        %v692 = vsel %vm691, %v682, %v686
        %vm693 = vcmp.lt.s32.totalorder %v683, %v687
        %v694 = vsel %vm693, %v683, %v687
        %vm695 = vcmp.lt.s32.totalorder %v684, %v688
        %v696 = vsel %vm695, %v684, %v688
        %vm697 = vcmp.lt.s32.totalorder %v690, %v692
        %v698 = vsel %vm697, %v690, %v692
        %vm699 = vcmp.lt.s32.totalorder %v694, %v696
        %v700 = vsel %vm699, %v694, %v696
        %vm701 = vcmp.lt.s32.totalorder %v698, %v700
        %v702 = vsel %vm701, %v698, %v700
        %v703 = vrot.slane %v702, 4
        %vm704 = vcmp.lt.s32.totalorder %v702, %v703
        %v705 = vsel %vm704, %v702, %v703
        %v706 = vrot.slane %v705, 2
        %vm707 = vcmp.lt.s32.totalorder %v705, %v706
        %v708 = vsel %vm707, %v705, %v706
        %v709 = vrot.slane %v708, 1
        %vm710 = vcmp.lt.s32.totalorder %v708, %v709
        %v711 = vsel %vm710, %v708, %v709
        %v712 = vand.u32 %v711, 4294967232
        %v714 = vrsqrt.pop %v712
        %v715 = vmul.f32 %v712, %v714
        %vm716 = vcmp.eq.f32.partialorder %v712, inf
        %v717 = vsel %vm716, %v712, %v715
        %vm718 = vcmp.eq.f32.partialorder %v712, 0.0
        %v719 = vand.u32 %v712, 2147483648
        %v720 = vsel %vm718, %v719, %v717
        %v721 = vadd.f32 %v720, 1e-08
        %v722 = vrcp.pop %v721
        %v723 = vmul.f32 1.0, %v722
        %vm724 = vcmp.eq.s32.totalorder %v681, %v711
        %vm725 = vcmp.eq.s32.totalorder %v682, %v711
        %vm726 = vcmp.eq.s32.totalorder %v683, %v711
        %vm727 = vcmp.eq.s32.totalorder %v684, %v711
        %vm728 = vcmp.eq.s32.totalorder %v685, %v711
        %vm729 = vcmp.eq.s32.totalorder %v686, %v711
        %vm730 = vcmp.eq.s32.totalorder %v687, %v711
        %vm731 = vcmp.eq.s32.totalorder %v688, %v711
        %v732 = vsel %vm724, 1, 0
        %v733 = vsel %vm725, 1, 0
        %v734 = vsel %vm726, 1, 0
        %v735 = vsel %vm727, 1, 0
        %v736 = vsel %vm728, 1, 0
        %v737 = vsel %vm729, 1, 0
        %v738 = vsel %vm730, 1, 0
        %v739 = vsel %vm731, 1, 0
        %v740 = vcvt.s32.f32 %v732
        %v741 = vcvt.s32.f32 %v733
        %v742 = vcvt.s32.f32 %v734
        %v743 = vcvt.s32.f32 %v735
        %v744 = vcvt.s32.f32 %v736
        %v745 = vcvt.s32.f32 %v737
        %v746 = vcvt.s32.f32 %v738
        %v747 = vcvt.s32.f32 %v739
        %v748 = vmul.f32 %v723, %v740
        %v749 = vmul.f32 %v723, %v741
        %v750 = vmul.f32 %v723, %v742
        %v751 = vmul.f32 %v723, %v743
        %v752 = vmul.f32 %v723, %v744
        %v753 = vmul.f32 %v723, %v745
        %v754 = vmul.f32 %v723, %v746
        %v755 = vmul.f32 %v723, %v747
        %v756 = vadd.f32 %v672, %v748
        %v757 = vadd.f32 %v673, %v749
        %v758 = vadd.f32 %v674, %v750
        %v759 = vadd.f32 %v675, %v751
        %v760 = vadd.f32 %v676, %v752
        %v761 = vadd.f32 %v677, %v753
        %v762 = vadd.f32 %v678, %v754
        %v763 = vadd.f32 %v679, %v755
        %v764 = vadd.f32 %v680, %v723
        %v765 = vsel %vm724, 2130706432, %v681
        %v766 = vsel %vm725, 2130706432, %v682
        %v767 = vsel %vm726, 2130706432, %v683
        %v768 = vsel %vm727, 2130706432, %v684
        %v769 = vsel %vm728, 2130706432, %v685
        %v770 = vsel %vm729, 2130706432, %v686
        %v771 = vsel %vm730, 2130706432, %v687
        %v772 = vsel %vm731, 2130706432, %v688
        %vm773 = vcmp.lt.s32.totalorder %v765, %v769
        %v774 = vsel %vm773, %v765, %v769
        %vm775 = vcmp.lt.s32.totalorder %v766, %v770
        %v776 = vsel %vm775, %v766, %v770
        %vm777 = vcmp.lt.s32.totalorder %v767, %v771
        %v778 = vsel %vm777, %v767, %v771
        %vm779 = vcmp.lt.s32.totalorder %v768, %v772
        %v780 = vsel %vm779, %v768, %v772
        %vm781 = vcmp.lt.s32.totalorder %v774, %v776
        %v782 = vsel %vm781, %v774, %v776
        %vm783 = vcmp.lt.s32.totalorder %v778, %v780
        %v784 = vsel %vm783, %v778, %v780
        %vm785 = vcmp.lt.s32.totalorder %v782, %v784
        %v786 = vsel %vm785, %v782, %v784
        %v787 = vrot.slane %v786, 4
        %vm788 = vcmp.lt.s32.totalorder %v786, %v787
        %v789 = vsel %vm788, %v786, %v787
        %v790 = vrot.slane %v789, 2
        %vm791 = vcmp.lt.s32.totalorder %v789, %v790
        %v792 = vsel %vm791, %v789, %v790
        %v793 = vrot.slane %v792, 1
        %vm794 = vcmp.lt.s32.totalorder %v792, %v793
        %v795 = vsel %vm794, %v792, %v793
        %v796 = vand.u32 %v795, 4294967232
        %v798 = vrsqrt.pop %v796
        %v799 = vmul.f32 %v796, %v798
        %vm800 = vcmp.eq.f32.partialorder %v796, inf
        %v801 = vsel %vm800, %v796, %v799
        %vm802 = vcmp.eq.f32.partialorder %v796, 0.0
        %v803 = vand.u32 %v796, 2147483648
        %v804 = vsel %vm802, %v803, %v801
        %v805 = vadd.f32 %v804, 1e-08
        %v806 = vrcp.pop %v805
        %v807 = vmul.f32 1.0, %v806
        %vm808 = vcmp.eq.s32.totalorder %v765, %v795
        %vm809 = vcmp.eq.s32.totalorder %v766, %v795
        %vm810 = vcmp.eq.s32.totalorder %v767, %v795
        %vm811 = vcmp.eq.s32.totalorder %v768, %v795
        %vm812 = vcmp.eq.s32.totalorder %v769, %v795
        %vm813 = vcmp.eq.s32.totalorder %v770, %v795
        %vm814 = vcmp.eq.s32.totalorder %v771, %v795
        %vm815 = vcmp.eq.s32.totalorder %v772, %v795
        %v816 = vsel %vm808, 1, 0
        %v817 = vsel %vm809, 1, 0
        %v818 = vsel %vm810, 1, 0
        %v819 = vsel %vm811, 1, 0
        %v820 = vsel %vm812, 1, 0
        %v821 = vsel %vm813, 1, 0
        %v822 = vsel %vm814, 1, 0
        %v823 = vsel %vm815, 1, 0
        %v824 = vcvt.s32.f32 %v816
        %v825 = vcvt.s32.f32 %v817
        %v826 = vcvt.s32.f32 %v818
        %v827 = vcvt.s32.f32 %v819
        %v828 = vcvt.s32.f32 %v820
        %v829 = vcvt.s32.f32 %v821
        %v830 = vcvt.s32.f32 %v822
        %v831 = vcvt.s32.f32 %v823
        %v832 = vmul.f32 %v807, %v824
        %v833 = vmul.f32 %v807, %v825
        %v834 = vmul.f32 %v807, %v826
        %v835 = vmul.f32 %v807, %v827
        %v836 = vmul.f32 %v807, %v828
        %v837 = vmul.f32 %v807, %v829
        %v838 = vmul.f32 %v807, %v830
        %v839 = vmul.f32 %v807, %v831
        %v840 = vadd.f32 %v756, %v832
        %v841 = vadd.f32 %v757, %v833
        %v842 = vadd.f32 %v758, %v834
        %v843 = vadd.f32 %v759, %v835
        %v844 = vadd.f32 %v760, %v836
        %v845 = vadd.f32 %v761, %v837
        %v846 = vadd.f32 %v762, %v838
        %v847 = vadd.f32 %v763, %v839
        %v848 = vadd.f32 %v764, %v807
        %v849 = vpack.c.bf16 %v841, %v840
        %v850 = vpack.c.bf16 %v843, %v842
        %v851 = vpack.c.bf16 %v845, %v844
        %v852 = vpack.c.bf16 %v847, %v846
        %v855 = vunpack.c.l.b16 %v432
        %v856 = vunpack.c.l.b16 %v433
        %v857 = vpack.c.b16 %v856, %v855
        %vm858 = vcmask 523264
        %v860 = vsel %vm858, %v857, 0
        %862 = vmatprep.subr.bf16.mxu0 0
        %863 = vmatpush1.bf16.msra.mxu0 %v849
        %864 = vmatprep.subr.bf16.mxu0 0
        %865 = vmatpush1.bf16.msra.mxu0 %v850
        %866 = vmatprep.subr.bf16.mxu0 0
        %867 = vmatpush1.bf16.msra.mxu0 %v851
        %868 = vmatprep.subr.bf16.mxu0 0
        %869 = vmatpush1.bf16.msra.mxu0 %v852
        %870 = vmatprep.subr.bf16.mxu0 0
        %871 = vmatpush1.bf16.msra.mxu0 0
        %872 = vmatprep.subr.bf16.mxu0 0
        %873 = vmatpush1.bf16.msra.mxu0 0
        %874 = vmatprep.subr.bf16.mxu0 0
        %875 = vmatpush1.bf16.msra.mxu0 0
        %876 = vmatprep.subr.bf16.mxu0 0
        %877 = vmatpush1.bf16.msra.mxu0 0
        %878 = vmatprep.subr.bf16.mxu0 0
        %879 = vmatpush1.bf16.msra.mxu0 0
        %880 = vmatprep.subr.bf16.mxu0 0
        %881 = vmatpush1.bf16.msra.mxu0 0
        %882 = vmatprep.subr.bf16.mxu0 0
        %883 = vmatpush1.bf16.msra.mxu0 0
        %884 = vmatprep.subr.bf16.mxu0 0
        %885 = vmatpush1.bf16.msra.mxu0 0
        %886 = vmatprep.subr.bf16.mxu0 0
        %887 = vmatpush1.bf16.msra.mxu0 0
        %888 = vmatprep.subr.bf16.mxu0 0
        %889 = vmatpush1.bf16.msra.mxu0 0
        %890 = vmatprep.subr.bf16.mxu0 0
        %891 = vmatpush1.bf16.msra.mxu0 0
        %892 = vmatprep.subr.bf16.mxu0 0
        %893 = vmatpush1.bf16.msra.mxu0 0
        %894 = vmatprep.mubr.bf16.mxu0 0
        %895 = vmatmul.mubr.bf16.gmra.mrb[0].mxu0 %v860
        %v896 = vpop.f32.mrb[0].mxu0
        %v897 = vadd.f32 0.0, %v896
        %v898 = vpop.f32.mrb[0].mxu0
        %v899 = vpop.f32.mrb[0].mxu0
        %v900 = vadd.f32 0.0, %v899
        %v901 = vpop.f32.mrb[0].mxu0
        %902 = vdwg.mxu0
        %v903 = vrcp.pop %v848
        %v904 = vmul.f32 %v897, %v903
        %v905 = vmul.f32 %v900, %v903
        %v906 = vld [vmem:[%s4] sm:$0xf]
        %v907 = vld [vmem:[%s4 + $0x4] sm:$0xf]
        %v908 = vld [vmem:[%s4 + $0x8] sm:$0xf]
        %v909 = vld [vmem:[%s4 + $0xc] sm:$0xf]
        %v910 = vpack.c.bf16 %v905, %v904
        %v911 = vld [vmem:[%s5] sm:$0xf]
        %v912 = vld [vmem:[%s5 + $0x4] sm:$0xf]
        %v913 = vld [vmem:[%s5 + $0x8] sm:$0xf]
        %v914 = vld [vmem:[%s5 + $0xc] sm:$0xf]
        %v919 = vunpack.c.l.b16 %v911
        %v920 = vunpack.c.l.b16 %v912
        %v921 = vunpack.c.l.b16 %v913
        %v922 = vunpack.c.l.b16 %v914
        %v923 = vpack.c.b16 %v920, %v919
        %v924 = vpack.c.b16 %v922, %v921
        %v926 = vsel %vm434, %v923, 0
        %v929 = vsel %vm434, %v924, 0
        %vm931 = vcmask 1043456
        %v933 = vsel %vm931, %v431, 0
        %935 = vmatprep.subr.bf16.mxu0 0
        %936 = vmatpush1.bf16.msra.mxu0 %v933
        %937 = vmatprep.subr.bf16.mxu0 0
        %938 = vmatpush1.bf16.msra.mxu0 0
        %939 = vmatprep.subr.bf16.mxu0 0
        %940 = vmatpush1.bf16.msra.mxu0 0
        %941 = vmatprep.subr.bf16.mxu0 0
        %942 = vmatpush1.bf16.msra.mxu0 0
        %943 = vmatprep.subr.bf16.mxu0 0
        %944 = vmatpush1.bf16.msra.mxu0 0
        %945 = vmatprep.subr.bf16.mxu0 0
        %946 = vmatpush1.bf16.msra.mxu0 0
        %947 = vmatprep.subr.bf16.mxu0 0
        %948 = vmatpush1.bf16.msra.mxu0 0
        %949 = vmatprep.subr.bf16.mxu0 0
        %950 = vmatpush1.bf16.msra.mxu0 0
        %951 = vmatprep.subr.bf16.mxu0 0
        %952 = vmatpush1.bf16.msra.mxu0 0
        %953 = vmatprep.subr.bf16.mxu0 0
        %954 = vmatpush1.bf16.msra.mxu0 0
        %955 = vmatprep.subr.bf16.mxu0 0
        %956 = vmatpush1.bf16.msra.mxu0 0
        %957 = vmatprep.subr.bf16.mxu0 0
        %958 = vmatpush1.bf16.msra.mxu0 0
        %959 = vmatprep.subr.bf16.mxu0 0
        %960 = vmatpush1.bf16.msra.mxu0 0
        %961 = vmatprep.subr.bf16.mxu0 0
        %962 = vmatpush1.bf16.msra.mxu0 0
        %963 = vmatprep.subr.bf16.mxu0 0
        %964 = vmatpush1.bf16.msra.mxu0 0
        %965 = vmatprep.subr.bf16.mxu0 0
        %966 = vmatpush1.bf16.msra.mxu0 0
        %967 = vmatprep.mubr.bf16.mxu0 0
        %968 = vmatmul.mubr.bf16.gmra.mrb[0].mxu0 %v926
        %v969 = vpop.f32.mrb[0].mxu0
        %v970 = vadd.f32 0.0, %v969
        %v971 = vpop.f32.mrb[0].mxu0
        %v972 = vpop.f32.mrb[0].mxu0
        %v973 = vadd.f32 0.0, %v972
        %v974 = vpop.f32.mrb[0].mxu0
        %975 = vmatprep.mubr.bf16.mxu0 0
        %976 = vmatmul.mubr.bf16.gmra.mrb[0].mxu0 %v929
        %v977 = vpop.f32.mrb[0].mxu0
        %v978 = vadd.f32 0.0, %v977
        %v979 = vpop.f32.mrb[0].mxu0
        %v980 = vpop.f32.mrb[0].mxu0
        %v981 = vadd.f32 0.0, %v980
        %v982 = vpop.f32.mrb[0].mxu0
        %983 = vdwg.mxu0
        %v988 = vunpack.c.l.b16 %v906
        %v989 = vunpack.c.l.b16 %v907
        %v990 = vunpack.c.l.b16 %v908
        %v991 = vunpack.c.l.b16 %v909
        %v992 = vpack.c.b16 %v989, %v988
        %v993 = vpack.c.b16 %v991, %v990
        %vm994 = vcmask 130048
        %v996 = vsel %vm994, %v992, 0
        %v999 = vsel %vm994, %v993, 0
        %1001 = vmatprep.subr.bf16.mxu0 0
        %1002 = vmatpush1.bf16.msra.mxu0 %v910
        %1003 = vmatprep.subr.bf16.mxu0 0
        %1004 = vmatpush1.bf16.msra.mxu0 0
        %1005 = vmatprep.subr.bf16.mxu0 0
        %1006 = vmatpush1.bf16.msra.mxu0 0
        %1007 = vmatprep.subr.bf16.mxu0 0
        %1008 = vmatpush1.bf16.msra.mxu0 0
        %1009 = vmatprep.subr.bf16.mxu0 0
        %1010 = vmatpush1.bf16.msra.mxu0 0
        %1011 = vmatprep.subr.bf16.mxu0 0
        %1012 = vmatpush1.bf16.msra.mxu0 0
        %1013 = vmatprep.subr.bf16.mxu0 0
        %1014 = vmatpush1.bf16.msra.mxu0 0
        %1015 = vmatprep.subr.bf16.mxu0 0
        %1016 = vmatpush1.bf16.msra.mxu0 0
        %1017 = vmatprep.subr.bf16.mxu0 0
        %1018 = vmatpush1.bf16.msra.mxu0 0
        %1019 = vmatprep.subr.bf16.mxu0 0
        %1020 = vmatpush1.bf16.msra.mxu0 0
        %1021 = vmatprep.subr.bf16.mxu0 0
        %1022 = vmatpush1.bf16.msra.mxu0 0
        %1023 = vmatprep.subr.bf16.mxu0 0
        %1024 = vmatpush1.bf16.msra.mxu0 0
        %1025 = vmatprep.subr.bf16.mxu0 0
        %1026 = vmatpush1.bf16.msra.mxu0 0
        %1027 = vmatprep.subr.bf16.mxu0 0
        %1028 = vmatpush1.bf16.msra.mxu0 0
        %1029 = vmatprep.subr.bf16.mxu0 0
        %1030 = vmatpush1.bf16.msra.mxu0 0
        %1031 = vmatprep.subr.bf16.mxu0 0
        %1032 = vmatpush1.bf16.msra.mxu0 0
        %1033 = vmatprep.mubr.bf16.mxu0 0
        %1034 = vmatmul.mubr.bf16.gmra.mrb[0].mxu0 %v996
        %v1035 = vpop.f32.mrb[0].mxu0
        %v1036 = vadd.f32 %v970, %v1035
        %v1037 = vpop.f32.mrb[0].mxu0
        %v1038 = vpop.f32.mrb[0].mxu0
        %v1039 = vadd.f32 %v973, %v1038
        %v1040 = vpop.f32.mrb[0].mxu0
        %1041 = vmatprep.mubr.bf16.mxu0 0
        %1042 = vmatmul.mubr.bf16.gmra.mrb[0].mxu0 %v999
        %v1043 = vpop.f32.mrb[0].mxu0
        %v1044 = vadd.f32 %v978, %v1043
        %v1045 = vpop.f32.mrb[0].mxu0
        %v1046 = vpop.f32.mrb[0].mxu0
        %v1047 = vadd.f32 %v981, %v1046
        %v1048 = vpop.f32.mrb[0].mxu0
        %1049 = vdwg.mxu0
        %v1050 = vld [vmem:[%s6] sm:$0xff]
        %v1051 = vld [vmem:[%s6 + $0x8] sm:$0xff]
        %v1052 = vld [vmem:[%s6 + $0x10] sm:$0xff]
        %v1053 = vld [vmem:[%s6 + $0x18] sm:$0xff]
        %1055 = vset.pattern.permute.xlu0 0
        %1056 = vperm.xlu0 %1055, %v1050
        %v1057 = vpop.permute.xlu0 %1056
        %1060 = vset.pattern.permute.xlu0 0
        %1061 = vperm.xlu0 %1060, %v1051
        %v1062 = vpop.permute.xlu0 %1061
        %1065 = vset.pattern.permute.xlu0 0
        %1066 = vperm.xlu0 %1065, %v1052
        %v1067 = vpop.permute.xlu0 %1066
        %1070 = vset.pattern.permute.xlu0 0
        %1071 = vperm.xlu0 %1070, %v1053
        %v1072 = vpop.permute.xlu0 %1071
        %v1074 = vadd.f32 %v1036, %v1057
        %v1075 = vadd.f32 %v1039, %v1062
        %v1076 = vadd.f32 %v1044, %v1067
        %v1077 = vadd.f32 %v1047, %v1072
        %v1078 = vmax.f32 %v1074, 0.0
        %v1079 = vmax.f32 %v1075, 0.0
        %v1080 = vmax.f32 %v1076, 0.0
        %v1081 = vmax.f32 %v1077, 0.0
        %v1082 = vld [vmem:[%s7] sm:$0xf]
        %v1083 = vld [vmem:[%s7 + $0x4] sm:$0xf]
        %v1084 = vld [vmem:[%s7 + $0x8] sm:$0xf]
        %v1085 = vld [vmem:[%s7 + $0xc] sm:$0xf]
        %v1086 = vpack.c.bf16 %v1079, %v1078
        %v1087 = vpack.c.bf16 %v1081, %v1080
        %v1088 = vld [vmem:[%s8] sm:$0xff]
        %v1089 = vld [vmem:[%s8 + $0x8] sm:$0xff]
        %v1090 = vld [vmem:[%s8 + $0x10] sm:$0xff]
        %v1091 = vld [vmem:[%s8 + $0x18] sm:$0xff]
        %1093 = vset.pattern.permute.xlu0 0
        %1094 = vperm.xlu0 %1093, %v1088
        %v1095 = vpop.permute.xlu0 %1094
        %1098 = vset.pattern.permute.xlu0 0
        %1099 = vperm.xlu0 %1098, %v1089
        %v1100 = vpop.permute.xlu0 %1099
        %1103 = vset.pattern.permute.xlu0 0
        %1104 = vperm.xlu0 %1103, %v1090
        %v1105 = vpop.permute.xlu0 %1104
        %1108 = vset.pattern.permute.xlu0 0
        %1109 = vperm.xlu0 %1108, %v1091
        %v1110 = vpop.permute.xlu0 %1109
        %v1116 = vunpack.c.l.b16 %v1082
        %v1117 = vunpack.c.l.b16 %v1083
        %v1118 = vunpack.c.l.b16 %v1084
        %v1119 = vunpack.c.l.b16 %v1085
        %v1120 = vpack.c.b16 %v1117, %v1116
        %v1121 = vpack.c.b16 %v1119, %v1118
        %vm1122 = vcmask 261120
        %v1124 = vsel %vm1122, %v1120, 0
        %v1127 = vsel %vm1122, %v1121, 0
        %1129 = vmatprep.subr.bf16.mxu0 0
        %1130 = vmatpush1.bf16.msra.mxu0 %v1086
        %1131 = vmatprep.subr.bf16.mxu0 0
        %1132 = vmatpush1.bf16.msra.mxu0 %v1087
        %1133 = vmatprep.subr.bf16.mxu0 0
        %1134 = vmatpush1.bf16.msra.mxu0 0
        %1135 = vmatprep.subr.bf16.mxu0 0
        %1136 = vmatpush1.bf16.msra.mxu0 0
        %1137 = vmatprep.subr.bf16.mxu0 0
        %1138 = vmatpush1.bf16.msra.mxu0 0
        %1139 = vmatprep.subr.bf16.mxu0 0
        %1140 = vmatpush1.bf16.msra.mxu0 0
        %1141 = vmatprep.subr.bf16.mxu0 0
        %1142 = vmatpush1.bf16.msra.mxu0 0
        %1143 = vmatprep.subr.bf16.mxu0 0
        %1144 = vmatpush1.bf16.msra.mxu0 0
        %1145 = vmatprep.subr.bf16.mxu0 0
        %1146 = vmatpush1.bf16.msra.mxu0 0
        %1147 = vmatprep.subr.bf16.mxu0 0
        %1148 = vmatpush1.bf16.msra.mxu0 0
        %1149 = vmatprep.subr.bf16.mxu0 0
        %1150 = vmatpush1.bf16.msra.mxu0 0
        %1151 = vmatprep.subr.bf16.mxu0 0
        %1152 = vmatpush1.bf16.msra.mxu0 0
        %1153 = vmatprep.subr.bf16.mxu0 0
        %1154 = vmatpush1.bf16.msra.mxu0 0
        %1155 = vmatprep.subr.bf16.mxu0 0
        %1156 = vmatpush1.bf16.msra.mxu0 0
        %1157 = vmatprep.subr.bf16.mxu0 0
        %1158 = vmatpush1.bf16.msra.mxu0 0
        %1159 = vmatprep.subr.bf16.mxu0 0
        %1160 = vmatpush1.bf16.msra.mxu0 0
        %1161 = vmatprep.mubr.bf16.mxu0 0
        %1162 = vmatmul.mubr.bf16.gmra.mrb[0].mxu0 %v1124
        %v1163 = vpop.f32.mrb[0].mxu0
        %v1164 = vadd.f32 %v1095, %v1163
        %v1165 = vpop.f32.mrb[0].mxu0
        %v1166 = vpop.f32.mrb[0].mxu0
        %v1167 = vadd.f32 %v1100, %v1166
        %v1168 = vpop.f32.mrb[0].mxu0
        %1169 = vmatprep.mubr.bf16.mxu0 0
        %1170 = vmatmul.mubr.bf16.gmra.mrb[0].mxu0 %v1127
        %v1171 = vpop.f32.mrb[0].mxu0
        %v1172 = vadd.f32 %v1105, %v1171
        %v1173 = vpop.f32.mrb[0].mxu0
        %v1174 = vpop.f32.mrb[0].mxu0
        %v1175 = vadd.f32 %v1110, %v1174
        %v1176 = vpop.f32.mrb[0].mxu0
        %1177 = vdwg.mxu0
        %v1178 = vmax.f32 %v1164, 0.0
        %v1179 = vmax.f32 %v1167, 0.0
        %v1180 = vmax.f32 %v1172, 0.0
        %v1181 = vmax.f32 %v1175, 0.0
        %1182 = vst [vmem:[%s396] sm:$0xff] %v1178
        %1183 = vst [vmem:[%s396 + $0x8] sm:$0xff] %v1179
        %1184 = vst [vmem:[%s396 + $0x10] sm:$0xff] %v1180
        %1185 = vst [vmem:[%s396 + $0x18] sm:$0xff] %v1181
        %s1186 = sand.u32 %s258, 1
        %s1187 = scalar_lea.sflag [#allocation3], %s1186
        %s1188 = sand.u32 %s258, 1
        %s1189 = smul.addr %s1188, 32
        %s1190 = scalar_lea.vmem [#allocation2], %s1189
        // Predicated region
        $region57: #{tpu_custom_call.1} parent=55 // pred_check
          %p1191 = pneg %p268
        $region58: #{tpu_custom_call.1} parent=55 // pred_check_branch
          %1193 = sbr.rel (%p1191) target = $region60
        $region59: #{tpu_custom_call.1} parent=55 // pred_region
          %s1195 = ssub.s32 512, 512
          %1196 = vsyncadd %s1187, %s1195
          %s1197 = smul.addr %s27, 4
          %s1198 = sadd.s32 %s28, %s1197
          %s1199 = smul.addr %s1198, 128
          %s1200 = scalar_lea.hbm %s9, %s1199
          %s1201 = sshll.u32 %s1190, 4
          %s1202 = int_to_ptr.vmem [resolvable:$true] %s1201
          %1207 = dma.vmem_to_hbm [thread:$0]  %s1202, 512, %s1200, %s1187, 128, 128, 8
        $region60: #{tpu_custom_call.1} parent=55 // pred_fallthru
          _
      $region56: #{tpu_custom_call.1} parent=5 // pred_fallthru
        _
      %p1208 = scmp.le.s32.totalorder 2, %s18
      // Predicated region
      $region61: #{tpu_custom_call.1} parent=5 // pred_check
        %p1209 = pneg %p1208
      $region62: #{tpu_custom_call.1} parent=5 // pred_check_branch
        %1211 = sbr.rel (%p1209) target = $region64
      $region63: #{tpu_custom_call.1} parent=5 // pred_region
        %s1212 = ssub.s32 %s18, 2
        // Predicated region
        $region65: #{tpu_custom_call.1} parent=63 // pred_check
          %p1213 = pneg %p274
        $region66: #{tpu_custom_call.1} parent=63 // pred_check_branch
          %1215 = sbr.rel (%p1213) target = $region68
        $region67: #{tpu_custom_call.1} parent=63 // pred_region
          %s1216 = sand.u32 %s259, 1
          %s1217 = scalar_lea.sflag [#allocation3], %s1216
          %s1218 = sand.u32 %s259, 1
          %s1219 = smul.addr %s1218, 32
          %s1220 = scalar_lea.vmem [#allocation2], %s1219
          %1221 = dma.done %s1217, 512
        $region68: #{tpu_custom_call.1} parent=63 // pred_fallthru
          _
      $region64: #{tpu_custom_call.1} parent=5 // pred_fallthru
        _
    $region6: #{tpu_custom_call.1} parent=1 // loop_footer
      %s22 = sadd.s32 1, %s18
    $region7: #{tpu_custom_call.1} parent=1 // loop_footer_branch
      %17 = sbr.rel target = $region3
    $region8: #{tpu_custom_call.1} parent=1 // loop_exit
      _
    %1222 = vsyncpa [#allocation3], 1
    %s1223 = scalar_lea.sflag [#allocation3], 1
    %1224 = vsyncpa %s1223, 1

</llo_original>
